<compile_context>
chip_gen: v7x
topology: tpu7x:2x2x1
jax: 0.10.0
libtpu: 0.0.40
codegen_flags: <defaults>
</compile_context>

<pallas_src>
import functools

import jax
import jax.numpy as jnp
from jax.experimental import pallas as pl
from jax.experimental.pallas import tpu as pltpu


def _round_up(n, m):
    return (n + m - 1) // m * m


def lstm_cell_kernel(xh_ref, c_ref, w_ref, b_ref, hc_out_ref):
    """Fused LSTMCell: one matmul + bias + gate nonlinearities + state update."""
    Hp = c_ref.shape[1]

    # f32 operands -> full-precision passes for parity with the f32 reference;
    # bf16 operands -> native MXU rate.  Accumulate in f32 either way.
    prec = (jax.lax.Precision.HIGHEST
            if xh_ref.dtype == jnp.float32 else jax.lax.Precision.DEFAULT)
    gates = jnp.dot(xh_ref[...], w_ref[...],
                    preferred_element_type=jnp.float32,
                    precision=prec)
    gates = gates + b_ref[...]                     # (bB, 4*Hp), bias pre-folded

    # Lane-aligned gate slices (each Hp is a multiple of 128).
    g_i = gates[:, 0 * Hp:1 * Hp]
    g_f = gates[:, 1 * Hp:2 * Hp]
    g_c = gates[:, 2 * Hp:3 * Hp]
    g_o = gates[:, 3 * Hp:4 * Hp]

    inputgate = jax.nn.sigmoid(g_i)
    forgetgate = jax.nn.sigmoid(g_f)
    cellgate = jnp.tanh(g_c)
    outputgate = jax.nn.sigmoid(g_o)

    c_new = forgetgate * c_ref[...] + inputgate * cellgate
    h_new = outputgate * jnp.tanh(c_new)

    # Single wide, lane-dense output slab: [h_new | c_new].
    hc_out_ref[...] = jnp.concatenate([h_new, c_new], axis=-1).astype(hc_out_ref.dtype)


def prepare_lstm_params(w_xh, w_hh, b_xh, b_hh, *, matmul_dtype=jnp.float32):
    """One-time parameter packing (hoisted out of the per-step path).

    w_xh: (4H, input_size)  torch nn.Linear weight layout
    w_hh: (4H, hidden)
    b_xh, b_hh: (4H,)

    Returns a dict with:
      W : (Kp, 4*Hp)  fused, transposed, gate-column-aligned, zero-padded weights
      b : (1, 4*Hp)   pre-folded bias (b_xh + b_hh), gate-column-aligned
    """
    four_h, input_size = w_xh.shape
    H = four_h // 4
    assert w_hh.shape == (4 * H, H)

    Hp = _round_up(H, 128)                 # lane-aligned gate width
    K = input_size + H
    Kp = _round_up(K, 128)                 # lane-aligned contraction dim for [x|h]

    w_xh = jnp.asarray(w_xh, jnp.float32)
    w_hh = jnp.asarray(w_hh, jnp.float32)
    b_sum = jnp.asarray(b_xh, jnp.float32) + jnp.asarray(b_hh, jnp.float32)

    W = jnp.zeros((Kp, 4 * Hp), jnp.float32)
    b = jnp.zeros((1, 4 * Hp), jnp.float32)
    for g in range(4):                     # gate order: i, f, c, o (torch.chunk)
        W = W.at[:input_size, g * Hp:g * Hp + H].set(w_xh[g * H:(g + 1) * H, :].T)
        W = W.at[input_size:input_size + H, g * Hp:g * Hp + H].set(
            w_hh[g * H:(g + 1) * H, :].T)
        b = b.at[0, g * Hp:g * Hp + H].set(b_sum[g * H:(g + 1) * H])

    return dict(W=W.astype(matmul_dtype), b=b, input_size=input_size,
                hidden=H, Hp=Hp, Kp=Kp, matmul_dtype=matmul_dtype)


@functools.partial(jax.jit, static_argnames=("block_b",))
def _lstm_cell_impl(xh, c_pad, W, b, *, block_b):
    Bp, Kp = xh.shape
    Hp = c_pad.shape[1]
    grid = (Bp // block_b,)

    cost = pl.CostEstimate(
        flops=2 * Bp * Kp * 4 * Hp,
        transcendentals=5 * Bp * Hp,
        bytes_accessed=(W.size * W.dtype.itemsize + b.size * 4
                        + xh.size * xh.dtype.itemsize + c_pad.size * 4
                        + Bp * 2 * Hp * 4),
    )

    hc = pl.pallas_call(
        lstm_cell_kernel,
        out_shape=jax.ShapeDtypeStruct((Bp, 2 * Hp), jnp.float32),
        grid=grid,
        in_specs=[
            pl.BlockSpec((block_b, Kp), lambda i: (i, 0)),       # [x|h] tile
            pl.BlockSpec((block_b, Hp), lambda i: (i, 0)),       # c tile
            pl.BlockSpec((Kp, 4 * Hp), lambda i: (0, 0)),        # W: VMEM-resident
            pl.BlockSpec((1, 4 * Hp), lambda i: (0, 0)),         # folded bias
        ],
        out_specs=pl.BlockSpec((block_b, 2 * Hp), lambda i: (i, 0)),
        compiler_params=pltpu.CompilerParams(
            dimension_semantics=("parallel",)),
        cost_estimate=cost,
    )(xh, c_pad, W, b)
    return hc


def lstm_cell(x, h, c, params, *, block_b=128):
    """
    x:    (B, input_size) ; h, c: (B, hidden)
    params: output of prepare_lstm_params (call once, reuse every step).
    Returns (h_new, c_new), each (B, hidden) float32.
    """
    B = x.shape[0]
    H, Hp, Kp = params["hidden"], params["Hp"], params["Kp"]
    input_size = params["input_size"]
    mdt = params["matmul_dtype"]

    # Pad batch to >= 8 (f32 sublane) and to a multiple of the batch block.
    Bp = _round_up(max(B, 8), 8)
    block_b = min(block_b, Bp)
    Bp = _round_up(Bp, block_b)

    # Fused, padded activation slab [x | h] -> (Bp, Kp).
    xh = jnp.zeros((Bp, Kp), jnp.float32)
    xh = xh.at[:B, :input_size].set(jnp.asarray(x, jnp.float32))
    xh = xh.at[:B, input_size:input_size + H].set(jnp.asarray(h, jnp.float32))
    xh = xh.astype(mdt)

    c_pad = jnp.zeros((Bp, Hp), jnp.float32)
    c_pad = c_pad.at[:B, :H].set(jnp.asarray(c, jnp.float32))

    hc = _lstm_cell_impl(xh, c_pad, params["W"], params["b"], block_b=block_b)
    h_new = hc[:B, :H]
    c_new = hc[:B, Hp:Hp + H]
    return h_new, c_new


def init_lstm_params(key, input_size, hidden_size):
    """Deterministic init mirroring RNNCellBase.reset_parameters + LSTMCell override."""
    std = 1.0 / jnp.sqrt(jnp.asarray(hidden_size, jnp.float32))
    k1, k2, k3, k4 = jax.random.split(key, 4)
    w_xh = jax.random.uniform(k1, (4 * hidden_size, input_size), jnp.float32, -std, std)
    w_hh = jax.random.uniform(k2, (4 * hidden_size, hidden_size), jnp.float32, -std, std)
    b_xh = jax.random.uniform(k3, (4 * hidden_size,), jnp.float32, -std, std)
    b_hh = jax.random.uniform(k4, (4 * hidden_size,), jnp.float32, -std, std)
    # LSTMCell.reset_parameters: forget-gate bias slice [H:2H] set to 1/H
    incr_bias = 1.0 / hidden_size
    b_xh = b_xh.at[hidden_size:2 * hidden_size].set(incr_bias)
    b_hh = b_hh.at[hidden_size:2 * hidden_size].set(incr_bias)
    return w_xh, w_hh, b_xh, b_hh


def lstm_cell_ref(x, h, c, w_xh, w_hh, b_xh, b_hh):
    """Pure-JAX reference replicating the PyTorch forward exactly."""
    gate_x = x @ w_xh.T + b_xh
    gate_h = h @ w_hh.T + b_hh
    x_i, x_f, x_c, x_o = jnp.split(gate_x, 4, axis=1)
    h_i, h_f, h_c, h_o = jnp.split(gate_h, 4, axis=1)
    inputgate = jax.nn.sigmoid(x_i + h_i)
    forgetgate = jax.nn.sigmoid(x_f + h_f)
    cellgate = jnp.tanh(x_c + h_c)
    outputgate = jax.nn.sigmoid(x_o + h_o)
    c_ = forgetgate * c + inputgate * cellgate
    h_ = outputgate * jnp.tanh(c_)
    return h_, c_


if __name__ == "__main__":
    batch, input_size, hidden_size = 2, 16, 32

    key = jax.random.PRNGKey(0)
    kx, kp = jax.random.split(key)
    x = jax.random.normal(kx, (batch, input_size), jnp.float32)
    # hc is None in the module -> zero hidden/cell states.
    h0 = jnp.zeros((batch, hidden_size), jnp.float32)
    c0 = jnp.zeros((batch, hidden_size), jnp.float32)

    w_xh, w_hh, b_xh, b_hh = init_lstm_params(kp, input_size, hidden_size)
    h_ref, c_ref = lstm_cell_ref(x, h0, c0, w_xh, w_hh, b_xh, b_hh)

    # --- f32 path (bit-faithful: precision=HIGHEST inside the kernel) ---
    params_f32 = prepare_lstm_params(w_xh, w_hh, b_xh, b_hh, matmul_dtype=jnp.float32)
    h_new, c_new = lstm_cell(x, h0, c0, params_f32)
    jax.block_until_ready((h_new, c_new))
    assert jnp.allclose(h_new, h_ref, atol=1e-5, rtol=1e-5)
    assert jnp.allclose(c_new, c_ref, atol=1e-5, rtol=1e-5)

    # --- bf16-matmul path (production setting; gate math stays f32) ---
    params_bf16 = prepare_lstm_params(w_xh, w_hh, b_xh, b_hh, matmul_dtype=jnp.bfloat16)
    h_bf, c_bf = lstm_cell(x, h0, c0, params_bf16)
    jax.block_until_ready((h_bf, c_bf))
    assert jnp.allclose(h_bf, h_ref, atol=5e-2, rtol=5e-2)
    assert jnp.allclose(c_bf, c_ref, atol=5e-2, rtol=5e-2)

    print("KERNEL_OK")
</pallas_src>

<mosaic_0001>
module attributes {stable_mosaic.version = 11 : i64} {
  func.func @lstm_cell_kernel(%arg0: i32, %arg1: memref<8x128xf32, #tpu.memory_space<vmem>>, %arg2: memref<8x128xf32, #tpu.memory_space<vmem>>, %arg3: memref<128x512xf32, #tpu.memory_space<vmem>>, %arg4: memref<1x512xf32, #tpu.memory_space<vmem>>, %arg5: memref<8x256xf32, #tpu.memory_space<vmem>>) attributes {dimension_semantics = [#tpu.dimension_semantics<parallel>], iteration_bounds = array<i64: 1>, scalar_prefetch = 0 : i64, scratch_operands = 0 : i64, tpu.core_type = #tpu.core_type<tc>, window_params = [{transform_indices = @transform_0, window_bounds = array<i64: 8, 128>}, {transform_indices = @transform_1, window_bounds = array<i64: 8, 128>}, {pipeline_mode = #tpu.pipeline_mode<synchronous>, transform_indices = @transform_2, window_bounds = array<i64: 128, 512>}, {pipeline_mode = #tpu.pipeline_mode<synchronous>, transform_indices = @transform_3, window_bounds = array<i64: 1, 512>}, {transform_indices = @transform_4, window_bounds = array<i64: 8, 256>}]} {
    %c0 = arith.constant 0 : index
    %c0_0 = arith.constant 0 : index
    %0 = vector.load %arg1[%c0, %c0_0] : memref<8x128xf32, #tpu.memory_space<vmem>>, vector<8x128xf32>
    %c0_1 = arith.constant 0 : index
    %c0_2 = arith.constant 0 : index
    %1 = vector.load %arg3[%c0_1, %c0_2] : memref<128x512xf32, #tpu.memory_space<vmem>>, vector<128x512xf32>
    %cst = arith.constant dense<0.000000e+00> : vector<8x512xf32>
    %2 = tpu.matmul %0, %1, %cst {dimension_numbers = #tpu.dot_dimension_numbers<[1], [0], [0], [1], [0, 0, 1, 1], [], []>, precision = #tpu.contract_precision<fp32>} : vector<8x128xf32>, vector<128x512xf32>, vector<8x512xf32> -> vector<8x512xf32>
    %c0_3 = arith.constant 0 : index
    %c0_4 = arith.constant 0 : index
    %3 = vector.load %arg4[%c0_3, %c0_4] : memref<1x512xf32, #tpu.memory_space<vmem>>, vector<1x512xf32>
    %4 = vector.broadcast %3 : vector<1x512xf32> to vector<8x512xf32>
    %5 = arith.addf %2, %4 : vector<8x512xf32>
    %6 = vector.extract_strided_slice %5 {offsets = [0, 0], sizes = [8, 128], strides = [1, 1]} : vector<8x512xf32> to vector<8x128xf32>
    %7 = vector.extract_strided_slice %5 {offsets = [0, 128], sizes = [8, 128], strides = [1, 1]} : vector<8x512xf32> to vector<8x128xf32>
    %8 = vector.extract_strided_slice %5 {offsets = [0, 256], sizes = [8, 128], strides = [1, 1]} : vector<8x512xf32> to vector<8x128xf32>
    %9 = vector.extract_strided_slice %5 {offsets = [0, 384], sizes = [8, 128], strides = [1, 1]} : vector<8x512xf32> to vector<8x128xf32>
    %10 = arith.negf %6 : vector<8x128xf32>
    %11 = math.exp %10 : vector<8x128xf32>
    %cst_5 = arith.constant 1.000000e+00 : f32
    %12 = vector.broadcast %cst_5 : f32 to vector<8x128xf32>
    %13 = arith.addf %12, %11 : vector<8x128xf32>
    %14 = arith.divf %12, %13 : vector<8x128xf32>
    %15 = arith.negf %7 : vector<8x128xf32>
    %16 = math.exp %15 : vector<8x128xf32>
    %cst_6 = arith.constant 1.000000e+00 : f32
    %17 = vector.broadcast %cst_6 : f32 to vector<8x128xf32>
    %18 = arith.addf %17, %16 : vector<8x128xf32>
    %19 = arith.divf %17, %18 : vector<8x128xf32>
    %20 = math.tanh %8 : vector<8x128xf32>
    %21 = arith.negf %9 : vector<8x128xf32>
    %22 = math.exp %21 : vector<8x128xf32>
    %cst_7 = arith.constant 1.000000e+00 : f32
    %23 = vector.broadcast %cst_7 : f32 to vector<8x128xf32>
    %24 = arith.addf %23, %22 : vector<8x128xf32>
    %25 = arith.divf %23, %24 : vector<8x128xf32>
    %c0_8 = arith.constant 0 : index
    %c0_9 = arith.constant 0 : index
    %26 = vector.load %arg2[%c0_8, %c0_9] : memref<8x128xf32, #tpu.memory_space<vmem>>, vector<8x128xf32>
    %27 = arith.mulf %19, %26 : vector<8x128xf32>
    %28 = arith.mulf %14, %20 : vector<8x128xf32>
    %29 = arith.addf %27, %28 : vector<8x128xf32>
    %30 = math.tanh %29 : vector<8x128xf32>
    %31 = arith.mulf %25, %30 : vector<8x128xf32>
    %32 = tpu.concatenate %31, %29 in 1 : vector<8x128xf32>, vector<8x128xf32> -> vector<8x256xf32>
    %c0_10 = arith.constant 0 : index
    %c0_11 = arith.constant 0 : index
    %33 = vector.load %arg5[%c0_10, %c0_11] : memref<8x256xf32, #tpu.memory_space<vmem>>, vector<8x256xf32>
    tpu.vector_store %arg5[%c0_10, %c0_11], %32 {strides = array<i32>} : memref<8x256xf32, #tpu.memory_space<vmem>>, vector<8x256xf32>,
    return
  }
  func.func @transform_0(%arg0: i32) -> (i32, i32) {
    %c0_i32 = arith.constant 0 : i32
    %c0_i32_0 = arith.constant 0 : i32
    return %arg0, %c0_i32 : i32, i32
  }
  func.func @transform_1(%arg0: i32) -> (i32, i32) {
    %c0_i32 = arith.constant 0 : i32
    %c0_i32_0 = arith.constant 0 : i32
    return %arg0, %c0_i32 : i32, i32
  }
  func.func @transform_2(%arg0: i32) -> (i32, i32) {
    %c0_i32 = arith.constant 0 : i32
    %c0_i32_0 = arith.constant 0 : i32
    %c0_i32_1 = arith.constant 0 : i32
    return %c0_i32, %c0_i32_0 : i32, i32
  }
  func.func @transform_3(%arg0: i32) -> (i32, i32) {
    %c0_i32 = arith.constant 0 : i32
    %c0_i32_0 = arith.constant 0 : i32
    %c0_i32_1 = arith.constant 0 : i32
    return %c0_i32, %c0_i32_0 : i32, i32
  }
  func.func @transform_4(%arg0: i32) -> (i32, i32) {
    %c0_i32 = arith.constant 0 : i32
    %c0_i32_0 = arith.constant 0 : i32
    return %arg0, %c0_i32 : i32, i32
  }
}

</mosaic_0001>

<llo_original>
// kernel: _lstm_cell_impl.1
$region0: #{_lstm_cell_impl.1}
  #allocation0 [shape = 'u32[]', space=smem, size = 0x4, offset = 0x4, fixed_abs, tag = 'smem constant byte address 0x4 - core index']
  #allocation1 [shape = 'u32[144,128]{1,0:T(1,128)}', space=vmem, size = 0x12000, scoped, tag = 'internal scratch']
  %s0 = inlined_call_operand.hbm [shape: f32[8,128], index: 0, kind: input, shape index: {}]
  %s1 = inlined_call_operand.hbm [shape: f32[8,128], index: 1, kind: input, shape index: {}]
  %s2 = inlined_call_operand.hbm [shape: f32[128,512], index: 2, kind: input, shape index: {}]
  %s3 = inlined_call_operand.vmem [shape: f32[1,512], index: 3, kind: input, shape index: {}]
  %s4 = inlined_call_operand.hbm [shape: f32[8,256], index: 4, kind: output, shape index: {}]
  %s5 = sld [smem:[#allocation0]]
  $region38: #{_lstm_cell_impl.1} parent=0
    _
  %s7 = ssub.s32 1, %s5
  %s8 = scalar_select 0, %s7, %s5
  $region1: #{_lstm_cell_impl.1} parent=0
    #allocation2 [shape = 'u8[4096]{0}', space=vmem, size = 0x1000, scoped, tag = 'input window, operand 0, single buffered']
    #allocation3 [shape = 's32[1]{0}', space=sflag, size = 0x4, scoped, tag = 'scoped memory for _lstm_cell_impl.1']
    #allocation4 [shape = 's32[1]{0}', space=sflag, size = 0x4, scoped, tag = 'scoped memory for _lstm_cell_impl.1']
    #allocation5 [shape = 'u8[4096]{0}', space=vmem, size = 0x1000, scoped, tag = 'input window, operand 1, single buffered']
    #allocation6 [shape = 's32[1]{0}', space=sflag, size = 0x4, scoped, tag = 'scoped memory for _lstm_cell_impl.1']
    #allocation7 [shape = 'u8[262144]{0}', space=vmem, size = 0x40000, scoped, tag = 'input window, operand 2, single buffered']
    #allocation8 [shape = 'u8[8192]{0}', space=vmem, size = 0x2000, scoped, tag = 'output window, operand 0, single buffered']
    %9 = vsyncpa [#allocation3], 0
    %10 = vsyncpa [#allocation6], 0
    %11 = vsyncpa [#allocation4], 0
    // Predicated region
    $region2: #{_lstm_cell_impl.1} parent=1 // pred_check
      _
    $region3: #{_lstm_cell_impl.1} parent=1 // pred_check_branch
      %13 = sbr.rel (0) target = $region5
    $region4: #{_lstm_cell_impl.1} parent=1 // pred_region
      %s15 = ssub.s32 128, 128
      %16 = vsyncadd [#allocation3], %s15
      %s18 = sshll.u32 [#allocation2], 4
      %s19 = int_to_ptr.vmem [resolvable:$true] %s18
      %21 = dma.hbm_to_vmem [thread:$0]  %s0, 128, %s19, [#allocation3]
    $region5: #{_lstm_cell_impl.1} parent=1 // pred_fallthru
      _
    // Predicated region
    $region6: #{_lstm_cell_impl.1} parent=1 // pred_check
      _
    $region7: #{_lstm_cell_impl.1} parent=1 // pred_check_branch
      %23 = sbr.rel (0) target = $region9
    $region8: #{_lstm_cell_impl.1} parent=1 // pred_region
      %s25 = ssub.s32 128, 128
      %26 = vsyncadd [#allocation6], %s25
      %s28 = sshll.u32 [#allocation5], 4
      %s29 = int_to_ptr.vmem [resolvable:$true] %s28
      %31 = dma.hbm_to_vmem [thread:$0]  %s1, 128, %s29, [#allocation6]
    $region9: #{_lstm_cell_impl.1} parent=1 // pred_fallthru
      _
    // Predicated region
    $region10: #{_lstm_cell_impl.1} parent=1 // pred_check
      _
    $region11: #{_lstm_cell_impl.1} parent=1 // pred_check_branch
      %33 = sbr.rel (0) target = $region13
    $region12: #{_lstm_cell_impl.1} parent=1 // pred_region
      %s35 = ssub.s32 8192, 8192
      %36 = vsyncadd [#allocation6], %s35
      %s37 = sshll.u32 [#allocation7], 4
      %s38 = int_to_ptr.vmem [resolvable:$true] %s37
      %43 = dma.hbm_to_vmem [thread:$0]  %s2, 8192, %s38, [#allocation6], 512, 512, 32
    $region13: #{_lstm_cell_impl.1} parent=1 // pred_fallthru
      _
    // Predicated region
    $region14: #{_lstm_cell_impl.1} parent=1 // pred_check
      _
    $region15: #{_lstm_cell_impl.1} parent=1 // pred_check_branch
      %45 = sbr.rel (0) target = $region17
    $region16: #{_lstm_cell_impl.1} parent=1 // pred_region
      _
    $region17: #{_lstm_cell_impl.1} parent=1 // pred_fallthru
      _
    // Predicated region
    $region18: #{_lstm_cell_impl.1} parent=1 // pred_check
      _
    $region19: #{_lstm_cell_impl.1} parent=1 // pred_check_branch
      %47 = sbr.rel (0) target = $region21
    $region20: #{_lstm_cell_impl.1} parent=1 // pred_region
      %48 = dma.done [#allocation3], 128
    $region21: #{_lstm_cell_impl.1} parent=1 // pred_fallthru
      _
    // Predicated region
    $region22: #{_lstm_cell_impl.1} parent=1 // pred_check
      _
    $region23: #{_lstm_cell_impl.1} parent=1 // pred_check_branch
      %50 = sbr.rel (0) target = $region25
    $region24: #{_lstm_cell_impl.1} parent=1 // pred_region
      %51 = dma.done [#allocation6], 128
    $region25: #{_lstm_cell_impl.1} parent=1 // pred_fallthru
      _
    // Predicated region
    $region26: #{_lstm_cell_impl.1} parent=1 // pred_check
      _
    $region27: #{_lstm_cell_impl.1} parent=1 // pred_check_branch
      %53 = sbr.rel (0) target = $region29
    $region28: #{_lstm_cell_impl.1} parent=1 // pred_region
      %54 = dma.done [#allocation6], 8192
    $region29: #{_lstm_cell_impl.1} parent=1 // pred_fallthru
      _
    %v55 = vld [vmem:[#allocation2] sm:$0xff]
    %v56 = vld [vmem:[#allocation7] sm:$0xff]
    %v57 = vld [vmem:[#allocation7 + $0x8] sm:$0xff]
    %v58 = vld [vmem:[#allocation7 + $0x10] sm:$0xff]
    %v59 = vld [vmem:[#allocation7 + $0x18] sm:$0xff]
    %v60 = vld [vmem:[#allocation7 + $0x20] sm:$0xff]
    %v61 = vld [vmem:[#allocation7 + $0x28] sm:$0xff]
    %v62 = vld [vmem:[#allocation7 + $0x30] sm:$0xff]
    %v63 = vld [vmem:[#allocation7 + $0x38] sm:$0xff]
    %v64 = vld [vmem:[#allocation7 + $0x40] sm:$0xff]
    %v65 = vld [vmem:[#allocation7 + $0x48] sm:$0xff]
    %v66 = vld [vmem:[#allocation7 + $0x50] sm:$0xff]
    %v67 = vld [vmem:[#allocation7 + $0x58] sm:$0xff]
    %v68 = vld [vmem:[#allocation7 + $0x60] sm:$0xff]
    %v69 = vld [vmem:[#allocation7 + $0x68] sm:$0xff]
    %v70 = vld [vmem:[#allocation7 + $0x70] sm:$0xff]
    %v71 = vld [vmem:[#allocation7 + $0x78] sm:$0xff]
    %v72 = vld [vmem:[#allocation7 + $0x80] sm:$0xff]
    %v73 = vld [vmem:[#allocation7 + $0x88] sm:$0xff]
    %v74 = vld [vmem:[#allocation7 + $0x90] sm:$0xff]
    %v75 = vld [vmem:[#allocation7 + $0x98] sm:$0xff]
    %v76 = vld [vmem:[#allocation7 + $0xa0] sm:$0xff]
    %v77 = vld [vmem:[#allocation7 + $0xa8] sm:$0xff]
    %v78 = vld [vmem:[#allocation7 + $0xb0] sm:$0xff]
    %v79 = vld [vmem:[#allocation7 + $0xb8] sm:$0xff]
    %v80 = vld [vmem:[#allocation7 + $0xc0] sm:$0xff]
    %v81 = vld [vmem:[#allocation7 + $0xc8] sm:$0xff]
    %v82 = vld [vmem:[#allocation7 + $0xd0] sm:$0xff]
    %v83 = vld [vmem:[#allocation7 + $0xd8] sm:$0xff]
    %v84 = vld [vmem:[#allocation7 + $0xe0] sm:$0xff]
    %v85 = vld [vmem:[#allocation7 + $0xe8] sm:$0xff]
    %v86 = vld [vmem:[#allocation7 + $0xf0] sm:$0xff]
    %v87 = vld [vmem:[#allocation7 + $0xf8] sm:$0xff]
    %v88 = vld [vmem:[#allocation7 + $0x100] sm:$0xff]
    %v89 = vld [vmem:[#allocation7 + $0x108] sm:$0xff]
    %v90 = vld [vmem:[#allocation7 + $0x110] sm:$0xff]
    %v91 = vld [vmem:[#allocation7 + $0x118] sm:$0xff]
    %v92 = vld [vmem:[#allocation7 + $0x120] sm:$0xff]
    %v93 = vld [vmem:[#allocation7 + $0x128] sm:$0xff]
    %v94 = vld [vmem:[#allocation7 + $0x130] sm:$0xff]
    %v95 = vld [vmem:[#allocation7 + $0x138] sm:$0xff]
    %v96 = vld [vmem:[#allocation7 + $0x140] sm:$0xff]
    %v97 = vld [vmem:[#allocation7 + $0x148] sm:$0xff]
    %v98 = vld [vmem:[#allocation7 + $0x150] sm:$0xff]
    %v99 = vld [vmem:[#allocation7 + $0x158] sm:$0xff]
    %v100 = vld [vmem:[#allocation7 + $0x160] sm:$0xff]
    %v101 = vld [vmem:[#allocation7 + $0x168] sm:$0xff]
    %v102 = vld [vmem:[#allocation7 + $0x170] sm:$0xff]
    %v103 = vld [vmem:[#allocation7 + $0x178] sm:$0xff]
    %v104 = vld [vmem:[#allocation7 + $0x180] sm:$0xff]
    %v105 = vld [vmem:[#allocation7 + $0x188] sm:$0xff]
    %v106 = vld [vmem:[#allocation7 + $0x190] sm:$0xff]
    %v107 = vld [vmem:[#allocation7 + $0x198] sm:$0xff]
    %v108 = vld [vmem:[#allocation7 + $0x1a0] sm:$0xff]
    %v109 = vld [vmem:[#allocation7 + $0x1a8] sm:$0xff]
    %v110 = vld [vmem:[#allocation7 + $0x1b0] sm:$0xff]
    %v111 = vld [vmem:[#allocation7 + $0x1b8] sm:$0xff]
    %v112 = vld [vmem:[#allocation7 + $0x1c0] sm:$0xff]
    %v113 = vld [vmem:[#allocation7 + $0x1c8] sm:$0xff]
    %v114 = vld [vmem:[#allocation7 + $0x1d0] sm:$0xff]
    %v115 = vld [vmem:[#allocation7 + $0x1d8] sm:$0xff]
    %v116 = vld [vmem:[#allocation7 + $0x1e0] sm:$0xff]
    %v117 = vld [vmem:[#allocation7 + $0x1e8] sm:$0xff]
    %v118 = vld [vmem:[#allocation7 + $0x1f0] sm:$0xff]
    %v119 = vld [vmem:[#allocation7 + $0x1f8] sm:$0xff]
    %v120 = vld [vmem:[%s3] sm:$0xf]
    %v122 = vlaneseq
    %v123 = vshrl.u32 %v122, 7
    %v124 = vsub.s32 0, %v123
    %v125 = vrot.slane %v120, %v124
    %v126 = vlaneseq
    %v127 = vshrl.u32 %v126, 7
    %v128 = vsub.s32 1, %v127
    %v129 = vrot.slane %v120, %v128
    %v130 = vlaneseq
    %v131 = vshrl.u32 %v130, 7
    %v132 = vsub.s32 2, %v131
    %v133 = vrot.slane %v120, %v132
    %v134 = vlaneseq
    %v135 = vshrl.u32 %v134, 7
    %v136 = vsub.s32 3, %v135
    %v137 = vrot.slane %v120, %v136
    %v142 = vand.u32 %v57, 4294901760
    %143 = vmatprep.subr.mxu0 %v142
    %v144 = vand.u32 %v56, 4294901760
    %145 = vmatpush1.msra.mxu0 %v144
    %v146 = vand.u32 %v61, 4294901760
    %147 = vmatprep.subr.mxu0 %v146
    %v148 = vand.u32 %v60, 4294901760
    %149 = vmatpush1.msra.mxu0 %v148
    %v150 = vand.u32 %v65, 4294901760
    %151 = vmatprep.subr.mxu0 %v150
    %v152 = vand.u32 %v64, 4294901760
    %153 = vmatpush1.msra.mxu0 %v152
    %v154 = vand.u32 %v69, 4294901760
    %155 = vmatprep.subr.mxu0 %v154
    %v156 = vand.u32 %v68, 4294901760
    %157 = vmatpush1.msra.mxu0 %v156
    %v158 = vand.u32 %v73, 4294901760
    %159 = vmatprep.subr.mxu0 %v158
    %v160 = vand.u32 %v72, 4294901760
    %161 = vmatpush1.msra.mxu0 %v160
    %v162 = vand.u32 %v77, 4294901760
    %163 = vmatprep.subr.mxu0 %v162
    %v164 = vand.u32 %v76, 4294901760
    %165 = vmatpush1.msra.mxu0 %v164
    %v166 = vand.u32 %v81, 4294901760
    %167 = vmatprep.subr.mxu0 %v166
    %v168 = vand.u32 %v80, 4294901760
    %169 = vmatpush1.msra.mxu0 %v168
    %v170 = vand.u32 %v85, 4294901760
    %171 = vmatprep.subr.mxu0 %v170
    %v172 = vand.u32 %v84, 4294901760
    %173 = vmatpush1.msra.mxu0 %v172
    %v174 = vand.u32 %v89, 4294901760
    %175 = vmatprep.subr.mxu0 %v174
    %v176 = vand.u32 %v88, 4294901760
    %177 = vmatpush1.msra.mxu0 %v176
    %v178 = vand.u32 %v93, 4294901760
    %179 = vmatprep.subr.mxu0 %v178
    %v180 = vand.u32 %v92, 4294901760
    %181 = vmatpush1.msra.mxu0 %v180
    %v182 = vand.u32 %v97, 4294901760
    %183 = vmatprep.subr.mxu0 %v182
    %v184 = vand.u32 %v96, 4294901760
    %185 = vmatpush1.msra.mxu0 %v184
    %v186 = vand.u32 %v101, 4294901760
    %187 = vmatprep.subr.mxu0 %v186
    %v188 = vand.u32 %v100, 4294901760
    %189 = vmatpush1.msra.mxu0 %v188
    %v190 = vand.u32 %v105, 4294901760
    %191 = vmatprep.subr.mxu0 %v190
    %v192 = vand.u32 %v104, 4294901760
    %193 = vmatpush1.msra.mxu0 %v192
    %v194 = vand.u32 %v109, 4294901760
    %195 = vmatprep.subr.mxu0 %v194
    %v196 = vand.u32 %v108, 4294901760
    %197 = vmatpush1.msra.mxu0 %v196
    %v198 = vand.u32 %v113, 4294901760
    %199 = vmatprep.subr.mxu0 %v198
    %v200 = vand.u32 %v112, 4294901760
    %201 = vmatpush1.msra.mxu0 %v200
    %v202 = vand.u32 %v117, 4294901760
    %203 = vmatprep.subr.mxu0 %v202
    %v204 = vand.u32 %v116, 4294901760
    %205 = vmatpush1.msra.mxu0 %v204
    %206 = vmatprep.subr.mxu0 0.0
    %207 = vmatpush1.msra.mxu0 0.0
    %208 = vmatprep.subr.mxu0 0.0
    %209 = vmatpush1.msra.mxu0 0.0
    %210 = vmatprep.subr.mxu0 0.0
    %211 = vmatpush1.msra.mxu0 0.0
    %212 = vmatprep.subr.mxu0 0.0
    %213 = vmatpush1.msra.mxu0 0.0
    %214 = vmatprep.subr.mxu0 0.0
    %215 = vmatpush1.msra.mxu0 0.0
    %216 = vmatprep.subr.mxu0 0.0
    %217 = vmatpush1.msra.mxu0 0.0
    %218 = vmatprep.subr.mxu0 0.0
    %219 = vmatpush1.msra.mxu0 0.0
    %220 = vmatprep.subr.mxu0 0.0
    %221 = vmatpush1.msra.mxu0 0.0
    %222 = vmatprep.subr.mxu0 0.0
    %223 = vmatpush1.msra.mxu0 0.0
    %224 = vmatprep.subr.mxu0 0.0
    %225 = vmatpush1.msra.mxu0 0.0
    %226 = vmatprep.subr.mxu0 0.0
    %227 = vmatpush1.msra.mxu0 0.0
    %228 = vmatprep.subr.mxu0 0.0
    %229 = vmatpush1.msra.mxu0 0.0
    %230 = vmatprep.subr.mxu0 0.0
    %231 = vmatpush1.msra.mxu0 0.0
    %232 = vmatprep.subr.mxu0 0.0
    %233 = vmatpush1.msra.mxu0 0.0
    %234 = vmatprep.subr.mxu0 0.0
    %235 = vmatpush1.msra.mxu0 0.0
    %236 = vmatprep.subr.mxu0 0.0
    %237 = vmatpush1.msra.mxu0 0.0
    %238 = vmatprep.mubr.f32.mxu0 0.0
    %v239 = vand.u32 %v55, 4294901760
    %v240 = vsub.f32 %v55, %v239
    %v241 = vand.u32 %v240, 4294901760
    %v242 = vsub.f32 %v240, %v241
    %v243 = vand.u32 %v242, 4294901760
    %244 = vmatmul.mubr.f32.gmra.mrb[0].mxu0 %v243
    %v245 = vpop.f32.mrb[0].mxu0
    %v246 = vadd.f32 %v125, %v245
    %v247 = vpop.f32.mrb[0].mxu0
    %v248 = vadd.f32 %v129, %v247
    %249 = vdwg.mxu0
    %v250 = vand.u32 %v57, 4294901760
    %v251 = vsub.f32 %v57, %v250
    %v252 = vand.u32 %v251, 4294901760
    %v253 = vsub.f32 %v251, %v252
    %v254 = vand.u32 %v253, 4294901760
    %255 = vmatprep.subr.mxu0 %v254
    %v256 = vand.u32 %v56, 4294901760
    %v257 = vsub.f32 %v56, %v256
    %v258 = vand.u32 %v257, 4294901760
    %v259 = vsub.f32 %v257, %v258
    %v260 = vand.u32 %v259, 4294901760
    %261 = vmatpush1.msra.mxu0 %v260
    %v262 = vand.u32 %v61, 4294901760
    %v263 = vsub.f32 %v61, %v262
    %v264 = vand.u32 %v263, 4294901760
    %v265 = vsub.f32 %v263, %v264
    %v266 = vand.u32 %v265, 4294901760
    %267 = vmatprep.subr.mxu0 %v266
    %v268 = vand.u32 %v60, 4294901760
    %v269 = vsub.f32 %v60, %v268
    %v270 = vand.u32 %v269, 4294901760
    %v271 = vsub.f32 %v269, %v270
    %v272 = vand.u32 %v271, 4294901760
    %273 = vmatpush1.msra.mxu0 %v272
    %v274 = vand.u32 %v65, 4294901760
    %v275 = vsub.f32 %v65, %v274
    %v276 = vand.u32 %v275, 4294901760
    %v277 = vsub.f32 %v275, %v276
    %v278 = vand.u32 %v277, 4294901760
    %279 = vmatprep.subr.mxu0 %v278
    %v280 = vand.u32 %v64, 4294901760
    %v281 = vsub.f32 %v64, %v280
    %v282 = vand.u32 %v281, 4294901760
    %v283 = vsub.f32 %v281, %v282
    %v284 = vand.u32 %v283, 4294901760
    %285 = vmatpush1.msra.mxu0 %v284
    %v286 = vand.u32 %v69, 4294901760
    %v287 = vsub.f32 %v69, %v286
    %v288 = vand.u32 %v287, 4294901760
    %v289 = vsub.f32 %v287, %v288
    %v290 = vand.u32 %v289, 4294901760
    %291 = vmatprep.subr.mxu0 %v290
    %v292 = vand.u32 %v68, 4294901760
    %v293 = vsub.f32 %v68, %v292
    %v294 = vand.u32 %v293, 4294901760
    %v295 = vsub.f32 %v293, %v294
    %v296 = vand.u32 %v295, 4294901760
    %297 = vmatpush1.msra.mxu0 %v296
    %v298 = vand.u32 %v73, 4294901760
    %v299 = vsub.f32 %v73, %v298
    %v300 = vand.u32 %v299, 4294901760
    %v301 = vsub.f32 %v299, %v300
    %v302 = vand.u32 %v301, 4294901760
    %303 = vmatprep.subr.mxu0 %v302
    %v304 = vand.u32 %v72, 4294901760
    %v305 = vsub.f32 %v72, %v304
    %v306 = vand.u32 %v305, 4294901760
    %v307 = vsub.f32 %v305, %v306
    %v308 = vand.u32 %v307, 4294901760
    %309 = vmatpush1.msra.mxu0 %v308
    %v310 = vand.u32 %v77, 4294901760
    %v311 = vsub.f32 %v77, %v310
    %v312 = vand.u32 %v311, 4294901760
    %v313 = vsub.f32 %v311, %v312
    %v314 = vand.u32 %v313, 4294901760
    %315 = vmatprep.subr.mxu0 %v314
    %v316 = vand.u32 %v76, 4294901760
    %v317 = vsub.f32 %v76, %v316
    %v318 = vand.u32 %v317, 4294901760
    %v319 = vsub.f32 %v317, %v318
    %v320 = vand.u32 %v319, 4294901760
    %321 = vmatpush1.msra.mxu0 %v320
    %v322 = vand.u32 %v81, 4294901760
    %v323 = vsub.f32 %v81, %v322
    %v324 = vand.u32 %v323, 4294901760
    %v325 = vsub.f32 %v323, %v324
    %v326 = vand.u32 %v325, 4294901760
    %327 = vmatprep.subr.mxu0 %v326
    %v328 = vand.u32 %v80, 4294901760
    %v329 = vsub.f32 %v80, %v328
    %v330 = vand.u32 %v329, 4294901760
    %v331 = vsub.f32 %v329, %v330
    %v332 = vand.u32 %v331, 4294901760
    %333 = vmatpush1.msra.mxu0 %v332
    %v334 = vand.u32 %v85, 4294901760
    %v335 = vsub.f32 %v85, %v334
    %v336 = vand.u32 %v335, 4294901760
    %v337 = vsub.f32 %v335, %v336
    %v338 = vand.u32 %v337, 4294901760
    %339 = vmatprep.subr.mxu0 %v338
    %v340 = vand.u32 %v84, 4294901760
    %v341 = vsub.f32 %v84, %v340
    %v342 = vand.u32 %v341, 4294901760
    %v343 = vsub.f32 %v341, %v342
    %v344 = vand.u32 %v343, 4294901760
    %345 = vmatpush1.msra.mxu0 %v344
    %v346 = vand.u32 %v89, 4294901760
    %v347 = vsub.f32 %v89, %v346
    %v348 = vand.u32 %v347, 4294901760
    %v349 = vsub.f32 %v347, %v348
    %v350 = vand.u32 %v349, 4294901760
    %351 = vmatprep.subr.mxu0 %v350
    %v352 = vand.u32 %v88, 4294901760
    %v353 = vsub.f32 %v88, %v352
    %v354 = vand.u32 %v353, 4294901760
    %v355 = vsub.f32 %v353, %v354
    %v356 = vand.u32 %v355, 4294901760
    %357 = vmatpush1.msra.mxu0 %v356
    %v358 = vand.u32 %v93, 4294901760
    %v359 = vsub.f32 %v93, %v358
    %v360 = vand.u32 %v359, 4294901760
    %v361 = vsub.f32 %v359, %v360
    %v362 = vand.u32 %v361, 4294901760
    %363 = vmatprep.subr.mxu0 %v362
    %v364 = vand.u32 %v92, 4294901760
    %v365 = vsub.f32 %v92, %v364
    %v366 = vand.u32 %v365, 4294901760
    %v367 = vsub.f32 %v365, %v366
    %v368 = vand.u32 %v367, 4294901760
    %369 = vmatpush1.msra.mxu0 %v368
    %v370 = vand.u32 %v97, 4294901760
    %v371 = vsub.f32 %v97, %v370
    %v372 = vand.u32 %v371, 4294901760
    %v373 = vsub.f32 %v371, %v372
    %v374 = vand.u32 %v373, 4294901760
    %375 = vmatprep.subr.mxu0 %v374
    %v376 = vand.u32 %v96, 4294901760
    %v377 = vsub.f32 %v96, %v376
    %v378 = vand.u32 %v377, 4294901760
    %v379 = vsub.f32 %v377, %v378
    %v380 = vand.u32 %v379, 4294901760
    %381 = vmatpush1.msra.mxu0 %v380
    %v382 = vand.u32 %v101, 4294901760
    %v383 = vsub.f32 %v101, %v382
    %v384 = vand.u32 %v383, 4294901760
    %v385 = vsub.f32 %v383, %v384
    %v386 = vand.u32 %v385, 4294901760
    %387 = vmatprep.subr.mxu0 %v386
    %v388 = vand.u32 %v100, 4294901760
    %v389 = vsub.f32 %v100, %v388
    %v390 = vand.u32 %v389, 4294901760
    %v391 = vsub.f32 %v389, %v390
    %v392 = vand.u32 %v391, 4294901760
    %393 = vmatpush1.msra.mxu0 %v392
    %v394 = vand.u32 %v105, 4294901760
    %v395 = vsub.f32 %v105, %v394
    %v396 = vand.u32 %v395, 4294901760
    %v397 = vsub.f32 %v395, %v396
    %v398 = vand.u32 %v397, 4294901760
    %399 = vmatprep.subr.mxu0 %v398
    %v400 = vand.u32 %v104, 4294901760
    %v401 = vsub.f32 %v104, %v400
    %v402 = vand.u32 %v401, 4294901760
    %v403 = vsub.f32 %v401, %v402
    %v404 = vand.u32 %v403, 4294901760
    %405 = vmatpush1.msra.mxu0 %v404
    %v406 = vand.u32 %v109, 4294901760
    %v407 = vsub.f32 %v109, %v406
    %v408 = vand.u32 %v407, 4294901760
    %v409 = vsub.f32 %v407, %v408
    %v410 = vand.u32 %v409, 4294901760
    %411 = vmatprep.subr.mxu0 %v410
    %v412 = vand.u32 %v108, 4294901760
    %v413 = vsub.f32 %v108, %v412
    %v414 = vand.u32 %v413, 4294901760
    %v415 = vsub.f32 %v413, %v414
    %v416 = vand.u32 %v415, 4294901760
    %417 = vmatpush1.msra.mxu0 %v416
    %v418 = vand.u32 %v113, 4294901760
    %v419 = vsub.f32 %v113, %v418
    %v420 = vand.u32 %v419, 4294901760
    %v421 = vsub.f32 %v419, %v420
    %v422 = vand.u32 %v421, 4294901760
    %423 = vmatprep.subr.mxu0 %v422
    %v424 = vand.u32 %v112, 4294901760
    %v425 = vsub.f32 %v112, %v424
    %v426 = vand.u32 %v425, 4294901760
    %v427 = vsub.f32 %v425, %v426
    %v428 = vand.u32 %v427, 4294901760
    %429 = vmatpush1.msra.mxu0 %v428
    %v430 = vand.u32 %v117, 4294901760
    %v431 = vsub.f32 %v117, %v430
    %v432 = vand.u32 %v431, 4294901760
    %v433 = vsub.f32 %v431, %v432
    %v434 = vand.u32 %v433, 4294901760
    %435 = vmatprep.subr.mxu0 %v434
    %v436 = vand.u32 %v116, 4294901760
    %v437 = vsub.f32 %v116, %v436
    %v438 = vand.u32 %v437, 4294901760
    %v439 = vsub.f32 %v437, %v438
    %v440 = vand.u32 %v439, 4294901760
    %441 = vmatpush1.msra.mxu0 %v440
    %442 = vmatprep.subr.mxu0 0.0
    %443 = vmatpush1.msra.mxu0 0.0
    %444 = vmatprep.subr.mxu0 0.0
    %445 = vmatpush1.msra.mxu0 0.0
    %446 = vmatprep.subr.mxu0 0.0
    %447 = vmatpush1.msra.mxu0 0.0
    %448 = vmatprep.subr.mxu0 0.0
    %449 = vmatpush1.msra.mxu0 0.0
    %450 = vmatprep.subr.mxu0 0.0
    %451 = vmatpush1.msra.mxu0 0.0
    %452 = vmatprep.subr.mxu0 0.0
    %453 = vmatpush1.msra.mxu0 0.0
    %454 = vmatprep.subr.mxu0 0.0
    %455 = vmatpush1.msra.mxu0 0.0
    %456 = vmatprep.subr.mxu0 0.0
    %457 = vmatpush1.msra.mxu0 0.0
    %458 = vmatprep.subr.mxu0 0.0
    %459 = vmatpush1.msra.mxu0 0.0
    %460 = vmatprep.subr.mxu0 0.0
    %461 = vmatpush1.msra.mxu0 0.0
    %462 = vmatprep.subr.mxu0 0.0
    %463 = vmatpush1.msra.mxu0 0.0
    %464 = vmatprep.subr.mxu0 0.0
    %465 = vmatpush1.msra.mxu0 0.0
    %466 = vmatprep.subr.mxu0 0.0
    %467 = vmatpush1.msra.mxu0 0.0
    %468 = vmatprep.subr.mxu0 0.0
    %469 = vmatpush1.msra.mxu0 0.0
    %470 = vmatprep.subr.mxu0 0.0
    %471 = vmatpush1.msra.mxu0 0.0
    %472 = vmatprep.subr.mxu0 0.0
    %473 = vmatpush1.msra.mxu0 0.0
    %474 = vmatprep.mubr.f32.mxu0 0.0
    %v475 = vand.u32 %v55, 4294901760
    %476 = vmatmul.mubr.f32.gmra.mrb[0].mxu0 %v475
    %v477 = vpop.f32.mrb[0].mxu0
    %v478 = vadd.f32 %v246, %v477
    %v479 = vpop.f32.mrb[0].mxu0
    %v480 = vadd.f32 %v248, %v479
    %481 = vdwg.mxu0
    %v482 = vand.u32 %v57, 4294901760
    %v483 = vsub.f32 %v57, %v482
    %484 = vmatprep.subr.mxu0 %v483
    %v485 = vand.u32 %v56, 4294901760
    %v486 = vsub.f32 %v56, %v485
    %487 = vmatpush1.msra.mxu0 %v486
    %v488 = vand.u32 %v61, 4294901760
    %v489 = vsub.f32 %v61, %v488
    %490 = vmatprep.subr.mxu0 %v489
    %v491 = vand.u32 %v60, 4294901760
    %v492 = vsub.f32 %v60, %v491
    %493 = vmatpush1.msra.mxu0 %v492
    %v494 = vand.u32 %v65, 4294901760
    %v495 = vsub.f32 %v65, %v494
    %496 = vmatprep.subr.mxu0 %v495
    %v497 = vand.u32 %v64, 4294901760
    %v498 = vsub.f32 %v64, %v497
    %499 = vmatpush1.msra.mxu0 %v498
    %v500 = vand.u32 %v69, 4294901760
    %v501 = vsub.f32 %v69, %v500
    %502 = vmatprep.subr.mxu0 %v501
    %v503 = vand.u32 %v68, 4294901760
    %v504 = vsub.f32 %v68, %v503
    %505 = vmatpush1.msra.mxu0 %v504
    %v506 = vand.u32 %v73, 4294901760
    %v507 = vsub.f32 %v73, %v506
    %508 = vmatprep.subr.mxu0 %v507
    %v509 = vand.u32 %v72, 4294901760
    %v510 = vsub.f32 %v72, %v509
    %511 = vmatpush1.msra.mxu0 %v510
    %v512 = vand.u32 %v77, 4294901760
    %v513 = vsub.f32 %v77, %v512
    %514 = vmatprep.subr.mxu0 %v513
    %v515 = vand.u32 %v76, 4294901760
    %v516 = vsub.f32 %v76, %v515
    %517 = vmatpush1.msra.mxu0 %v516
    %v518 = vand.u32 %v81, 4294901760
    %v519 = vsub.f32 %v81, %v518
    %520 = vmatprep.subr.mxu0 %v519
    %v521 = vand.u32 %v80, 4294901760
    %v522 = vsub.f32 %v80, %v521
    %523 = vmatpush1.msra.mxu0 %v522
    %v524 = vand.u32 %v85, 4294901760
    %v525 = vsub.f32 %v85, %v524
    %526 = vmatprep.subr.mxu0 %v525
    %v527 = vand.u32 %v84, 4294901760
    %v528 = vsub.f32 %v84, %v527
    %529 = vmatpush1.msra.mxu0 %v528
    %v530 = vand.u32 %v89, 4294901760
    %v531 = vsub.f32 %v89, %v530
    %532 = vmatprep.subr.mxu0 %v531
    %v533 = vand.u32 %v88, 4294901760
    %v534 = vsub.f32 %v88, %v533
    %535 = vmatpush1.msra.mxu0 %v534
    %v536 = vand.u32 %v93, 4294901760
    %v537 = vsub.f32 %v93, %v536
    %538 = vmatprep.subr.mxu0 %v537
    %v539 = vand.u32 %v92, 4294901760
    %v540 = vsub.f32 %v92, %v539
    %541 = vmatpush1.msra.mxu0 %v540
    %v542 = vand.u32 %v97, 4294901760
    %v543 = vsub.f32 %v97, %v542
    %544 = vmatprep.subr.mxu0 %v543
    %v545 = vand.u32 %v96, 4294901760
    %v546 = vsub.f32 %v96, %v545
    %547 = vmatpush1.msra.mxu0 %v546
    %v548 = vand.u32 %v101, 4294901760
    %v549 = vsub.f32 %v101, %v548
    %550 = vmatprep.subr.mxu0 %v549
    %v551 = vand.u32 %v100, 4294901760
    %v552 = vsub.f32 %v100, %v551
    %553 = vmatpush1.msra.mxu0 %v552
    %v554 = vand.u32 %v105, 4294901760
    %v555 = vsub.f32 %v105, %v554
    %556 = vmatprep.subr.mxu0 %v555
    %v557 = vand.u32 %v104, 4294901760
    %v558 = vsub.f32 %v104, %v557
    %559 = vmatpush1.msra.mxu0 %v558
    %v560 = vand.u32 %v109, 4294901760
    %v561 = vsub.f32 %v109, %v560
    %562 = vmatprep.subr.mxu0 %v561
    %v563 = vand.u32 %v108, 4294901760
    %v564 = vsub.f32 %v108, %v563
    %565 = vmatpush1.msra.mxu0 %v564
    %v566 = vand.u32 %v113, 4294901760
    %v567 = vsub.f32 %v113, %v566
    %568 = vmatprep.subr.mxu0 %v567
    %v569 = vand.u32 %v112, 4294901760
    %v570 = vsub.f32 %v112, %v569
    %571 = vmatpush1.msra.mxu0 %v570
    %v572 = vand.u32 %v117, 4294901760
    %v573 = vsub.f32 %v117, %v572
    %574 = vmatprep.subr.mxu0 %v573
    %v575 = vand.u32 %v116, 4294901760
    %v576 = vsub.f32 %v116, %v575
    %577 = vmatpush1.msra.mxu0 %v576
    %578 = vmatprep.subr.mxu0 0.0
    %579 = vmatpush1.msra.mxu0 0.0
    %580 = vmatprep.subr.mxu0 0.0
    %581 = vmatpush1.msra.mxu0 0.0
    %582 = vmatprep.subr.mxu0 0.0
    %583 = vmatpush1.msra.mxu0 0.0
    %584 = vmatprep.subr.mxu0 0.0
    %585 = vmatpush1.msra.mxu0 0.0
    %586 = vmatprep.subr.mxu0 0.0
    %587 = vmatpush1.msra.mxu0 0.0
    %588 = vmatprep.subr.mxu0 0.0
    %589 = vmatpush1.msra.mxu0 0.0
    %590 = vmatprep.subr.mxu0 0.0
    %591 = vmatpush1.msra.mxu0 0.0
    %592 = vmatprep.subr.mxu0 0.0
    %593 = vmatpush1.msra.mxu0 0.0
    %594 = vmatprep.subr.mxu0 0.0
    %595 = vmatpush1.msra.mxu0 0.0
    %596 = vmatprep.subr.mxu0 0.0
    %597 = vmatpush1.msra.mxu0 0.0
    %598 = vmatprep.subr.mxu0 0.0
    %599 = vmatpush1.msra.mxu0 0.0
    %600 = vmatprep.subr.mxu0 0.0
    %601 = vmatpush1.msra.mxu0 0.0
    %602 = vmatprep.subr.mxu0 0.0
    %603 = vmatpush1.msra.mxu0 0.0
    %604 = vmatprep.subr.mxu0 0.0
    %605 = vmatpush1.msra.mxu0 0.0
    %606 = vmatprep.subr.mxu0 0.0
    %607 = vmatpush1.msra.mxu0 0.0
    %608 = vmatprep.subr.mxu0 0.0
    %609 = vmatpush1.msra.mxu0 0.0
    %610 = vmatprep.mubr.f32.mxu0 0.0
    %v611 = vand.u32 %v55, 4294901760
    %v612 = vsub.f32 %v55, %v611
    %613 = vmatmul.mubr.f32.gmra.mrb[0].mxu0 %v612
    %v614 = vpop.f32.mrb[0].mxu0
    %v615 = vadd.f32 %v478, %v614
    %v616 = vpop.f32.mrb[0].mxu0
    %v617 = vadd.f32 %v480, %v616
    %618 = vdwg.mxu0
    %v619 = vand.u32 %v57, 4294901760
    %620 = vmatprep.subr.mxu0 %v619
    %v621 = vand.u32 %v56, 4294901760
    %622 = vmatpush1.msra.mxu0 %v621
    %v623 = vand.u32 %v61, 4294901760
    %624 = vmatprep.subr.mxu0 %v623
    %v625 = vand.u32 %v60, 4294901760
    %626 = vmatpush1.msra.mxu0 %v625
    %v627 = vand.u32 %v65, 4294901760
    %628 = vmatprep.subr.mxu0 %v627
    %v629 = vand.u32 %v64, 4294901760
    %630 = vmatpush1.msra.mxu0 %v629
    %v631 = vand.u32 %v69, 4294901760
    %632 = vmatprep.subr.mxu0 %v631
    %v633 = vand.u32 %v68, 4294901760
    %634 = vmatpush1.msra.mxu0 %v633
    %v635 = vand.u32 %v73, 4294901760
    %636 = vmatprep.subr.mxu0 %v635
    %v637 = vand.u32 %v72, 4294901760
    %638 = vmatpush1.msra.mxu0 %v637
    %v639 = vand.u32 %v77, 4294901760
    %640 = vmatprep.subr.mxu0 %v639
    %v641 = vand.u32 %v76, 4294901760
    %642 = vmatpush1.msra.mxu0 %v641
    %v643 = vand.u32 %v81, 4294901760
    %644 = vmatprep.subr.mxu0 %v643
    %v645 = vand.u32 %v80, 4294901760
    %646 = vmatpush1.msra.mxu0 %v645
    %v647 = vand.u32 %v85, 4294901760
    %648 = vmatprep.subr.mxu0 %v647
    %v649 = vand.u32 %v84, 4294901760
    %650 = vmatpush1.msra.mxu0 %v649
    %v651 = vand.u32 %v89, 4294901760
    %652 = vmatprep.subr.mxu0 %v651
    %v653 = vand.u32 %v88, 4294901760
    %654 = vmatpush1.msra.mxu0 %v653
    %v655 = vand.u32 %v93, 4294901760
    %656 = vmatprep.subr.mxu0 %v655
    %v657 = vand.u32 %v92, 4294901760
    %658 = vmatpush1.msra.mxu0 %v657
    %v659 = vand.u32 %v97, 4294901760
    %660 = vmatprep.subr.mxu0 %v659
    %v661 = vand.u32 %v96, 4294901760
    %662 = vmatpush1.msra.mxu0 %v661
    %v663 = vand.u32 %v101, 4294901760
    %664 = vmatprep.subr.mxu0 %v663
    %v665 = vand.u32 %v100, 4294901760
    %666 = vmatpush1.msra.mxu0 %v665
    %v667 = vand.u32 %v105, 4294901760
    %668 = vmatprep.subr.mxu0 %v667
    %v669 = vand.u32 %v104, 4294901760
    %670 = vmatpush1.msra.mxu0 %v669
    %v671 = vand.u32 %v109, 4294901760
    %672 = vmatprep.subr.mxu0 %v671
    %v673 = vand.u32 %v108, 4294901760
    %674 = vmatpush1.msra.mxu0 %v673
    %v675 = vand.u32 %v113, 4294901760
    %676 = vmatprep.subr.mxu0 %v675
    %v677 = vand.u32 %v112, 4294901760
    %678 = vmatpush1.msra.mxu0 %v677
    %v679 = vand.u32 %v117, 4294901760
    %680 = vmatprep.subr.mxu0 %v679
    %v681 = vand.u32 %v116, 4294901760
    %682 = vmatpush1.msra.mxu0 %v681
    %683 = vmatprep.subr.mxu0 0.0
    %684 = vmatpush1.msra.mxu0 0.0
    %685 = vmatprep.subr.mxu0 0.0
    %686 = vmatpush1.msra.mxu0 0.0
    %687 = vmatprep.subr.mxu0 0.0
    %688 = vmatpush1.msra.mxu0 0.0
    %689 = vmatprep.subr.mxu0 0.0
    %690 = vmatpush1.msra.mxu0 0.0
    %691 = vmatprep.subr.mxu0 0.0
    %692 = vmatpush1.msra.mxu0 0.0
    %693 = vmatprep.subr.mxu0 0.0
    %694 = vmatpush1.msra.mxu0 0.0
    %695 = vmatprep.subr.mxu0 0.0
    %696 = vmatpush1.msra.mxu0 0.0
    %697 = vmatprep.subr.mxu0 0.0
    %698 = vmatpush1.msra.mxu0 0.0
    %699 = vmatprep.subr.mxu0 0.0
    %700 = vmatpush1.msra.mxu0 0.0
    %701 = vmatprep.subr.mxu0 0.0
    %702 = vmatpush1.msra.mxu0 0.0
    %703 = vmatprep.subr.mxu0 0.0
    %704 = vmatpush1.msra.mxu0 0.0
    %705 = vmatprep.subr.mxu0 0.0
    %706 = vmatpush1.msra.mxu0 0.0
    %707 = vmatprep.subr.mxu0 0.0
    %708 = vmatpush1.msra.mxu0 0.0
    %709 = vmatprep.subr.mxu0 0.0
    %710 = vmatpush1.msra.mxu0 0.0
    %711 = vmatprep.subr.mxu0 0.0
    %712 = vmatpush1.msra.mxu0 0.0
    %713 = vmatprep.subr.mxu0 0.0
    %714 = vmatpush1.msra.mxu0 0.0
    %715 = vmatprep.mubr.f32.mxu0 0.0
    %v716 = vand.u32 %v55, 4294901760
    %v717 = vsub.f32 %v55, %v716
    %v718 = vand.u32 %v717, 4294901760
    %719 = vmatmul.mubr.f32.gmra.mrb[0].mxu0 %v718
    %v720 = vpop.f32.mrb[0].mxu0
    %v721 = vadd.f32 %v615, %v720
    %v722 = vpop.f32.mrb[0].mxu0
    %v723 = vadd.f32 %v617, %v722
    %724 = vdwg.mxu0
    %v725 = vand.u32 %v57, 4294901760
    %v726 = vsub.f32 %v57, %v725
    %v727 = vand.u32 %v726, 4294901760
    %728 = vmatprep.subr.mxu0 %v727
    %v729 = vand.u32 %v56, 4294901760
    %v730 = vsub.f32 %v56, %v729
    %v731 = vand.u32 %v730, 4294901760
    %732 = vmatpush1.msra.mxu0 %v731
    %v733 = vand.u32 %v61, 4294901760
    %v734 = vsub.f32 %v61, %v733
    %v735 = vand.u32 %v734, 4294901760
    %736 = vmatprep.subr.mxu0 %v735
    %v737 = vand.u32 %v60, 4294901760
    %v738 = vsub.f32 %v60, %v737
    %v739 = vand.u32 %v738, 4294901760
    %740 = vmatpush1.msra.mxu0 %v739
    %v741 = vand.u32 %v65, 4294901760
    %v742 = vsub.f32 %v65, %v741
    %v743 = vand.u32 %v742, 4294901760
    %744 = vmatprep.subr.mxu0 %v743
    %v745 = vand.u32 %v64, 4294901760
    %v746 = vsub.f32 %v64, %v745
    %v747 = vand.u32 %v746, 4294901760
    %748 = vmatpush1.msra.mxu0 %v747
    %v749 = vand.u32 %v69, 4294901760
    %v750 = vsub.f32 %v69, %v749
    %v751 = vand.u32 %v750, 4294901760
    %752 = vmatprep.subr.mxu0 %v751
    %v753 = vand.u32 %v68, 4294901760
    %v754 = vsub.f32 %v68, %v753
    %v755 = vand.u32 %v754, 4294901760
    %756 = vmatpush1.msra.mxu0 %v755
    %v757 = vand.u32 %v73, 4294901760
    %v758 = vsub.f32 %v73, %v757
    %v759 = vand.u32 %v758, 4294901760
    %760 = vmatprep.subr.mxu0 %v759
    %v761 = vand.u32 %v72, 4294901760
    %v762 = vsub.f32 %v72, %v761
    %v763 = vand.u32 %v762, 4294901760
    %764 = vmatpush1.msra.mxu0 %v763
    %v765 = vand.u32 %v77, 4294901760
    %v766 = vsub.f32 %v77, %v765
    %v767 = vand.u32 %v766, 4294901760
    %768 = vmatprep.subr.mxu0 %v767
    %v769 = vand.u32 %v76, 4294901760
    %v770 = vsub.f32 %v76, %v769
    %v771 = vand.u32 %v770, 4294901760
    %772 = vmatpush1.msra.mxu0 %v771
    %v773 = vand.u32 %v81, 4294901760
    %v774 = vsub.f32 %v81, %v773
    %v775 = vand.u32 %v774, 4294901760
    %776 = vmatprep.subr.mxu0 %v775
    %v777 = vand.u32 %v80, 4294901760
    %v778 = vsub.f32 %v80, %v777
    %v779 = vand.u32 %v778, 4294901760
    %780 = vmatpush1.msra.mxu0 %v779
    %v781 = vand.u32 %v85, 4294901760
    %v782 = vsub.f32 %v85, %v781
    %v783 = vand.u32 %v782, 4294901760
    %784 = vmatprep.subr.mxu0 %v783
    %v785 = vand.u32 %v84, 4294901760
    %v786 = vsub.f32 %v84, %v785
    %v787 = vand.u32 %v786, 4294901760
    %788 = vmatpush1.msra.mxu0 %v787
    %v789 = vand.u32 %v89, 4294901760
    %v790 = vsub.f32 %v89, %v789
    %v791 = vand.u32 %v790, 4294901760
    %792 = vmatprep.subr.mxu0 %v791
    %v793 = vand.u32 %v88, 4294901760
    %v794 = vsub.f32 %v88, %v793
    %v795 = vand.u32 %v794, 4294901760
    %796 = vmatpush1.msra.mxu0 %v795
    %v797 = vand.u32 %v93, 4294901760
    %v798 = vsub.f32 %v93, %v797
    %v799 = vand.u32 %v798, 4294901760
    %800 = vmatprep.subr.mxu0 %v799
    %v801 = vand.u32 %v92, 4294901760
    %v802 = vsub.f32 %v92, %v801
    %v803 = vand.u32 %v802, 4294901760
    %804 = vmatpush1.msra.mxu0 %v803
    %v805 = vand.u32 %v97, 4294901760
    %v806 = vsub.f32 %v97, %v805
    %v807 = vand.u32 %v806, 4294901760
    %808 = vmatprep.subr.mxu0 %v807
    %v809 = vand.u32 %v96, 4294901760
    %v810 = vsub.f32 %v96, %v809
    %v811 = vand.u32 %v810, 4294901760
    %812 = vmatpush1.msra.mxu0 %v811
    %v813 = vand.u32 %v101, 4294901760
    %v814 = vsub.f32 %v101, %v813
    %v815 = vand.u32 %v814, 4294901760
    %816 = vmatprep.subr.mxu0 %v815
    %v817 = vand.u32 %v100, 4294901760
    %v818 = vsub.f32 %v100, %v817
    %v819 = vand.u32 %v818, 4294901760
    %820 = vmatpush1.msra.mxu0 %v819
    %v821 = vand.u32 %v105, 4294901760
    %v822 = vsub.f32 %v105, %v821
    %v823 = vand.u32 %v822, 4294901760
    %824 = vmatprep.subr.mxu0 %v823
    %v825 = vand.u32 %v104, 4294901760
    %v826 = vsub.f32 %v104, %v825
    %v827 = vand.u32 %v826, 4294901760
    %828 = vmatpush1.msra.mxu0 %v827
    %v829 = vand.u32 %v109, 4294901760
    %v830 = vsub.f32 %v109, %v829
    %v831 = vand.u32 %v830, 4294901760
    %832 = vmatprep.subr.mxu0 %v831
    %v833 = vand.u32 %v108, 4294901760
    %v834 = vsub.f32 %v108, %v833
    %v835 = vand.u32 %v834, 4294901760
    %836 = vmatpush1.msra.mxu0 %v835
    %v837 = vand.u32 %v113, 4294901760
    %v838 = vsub.f32 %v113, %v837
    %v839 = vand.u32 %v838, 4294901760
    %840 = vmatprep.subr.mxu0 %v839
    %v841 = vand.u32 %v112, 4294901760
    %v842 = vsub.f32 %v112, %v841
    %v843 = vand.u32 %v842, 4294901760
    %844 = vmatpush1.msra.mxu0 %v843
    %v845 = vand.u32 %v117, 4294901760
    %v846 = vsub.f32 %v117, %v845
    %v847 = vand.u32 %v846, 4294901760
    %848 = vmatprep.subr.mxu0 %v847
    %v849 = vand.u32 %v116, 4294901760
    %v850 = vsub.f32 %v116, %v849
    %v851 = vand.u32 %v850, 4294901760
    %852 = vmatpush1.msra.mxu0 %v851
    %853 = vmatprep.subr.mxu0 0.0
    %854 = vmatpush1.msra.mxu0 0.0
    %855 = vmatprep.subr.mxu0 0.0
    %856 = vmatpush1.msra.mxu0 0.0
    %857 = vmatprep.subr.mxu0 0.0
    %858 = vmatpush1.msra.mxu0 0.0
    %859 = vmatprep.subr.mxu0 0.0
    %860 = vmatpush1.msra.mxu0 0.0
    %861 = vmatprep.subr.mxu0 0.0
    %862 = vmatpush1.msra.mxu0 0.0
    %863 = vmatprep.subr.mxu0 0.0
    %864 = vmatpush1.msra.mxu0 0.0
    %865 = vmatprep.subr.mxu0 0.0
    %866 = vmatpush1.msra.mxu0 0.0
    %867 = vmatprep.subr.mxu0 0.0
    %868 = vmatpush1.msra.mxu0 0.0
    %869 = vmatprep.subr.mxu0 0.0
    %870 = vmatpush1.msra.mxu0 0.0
    %871 = vmatprep.subr.mxu0 0.0
    %872 = vmatpush1.msra.mxu0 0.0
    %873 = vmatprep.subr.mxu0 0.0
    %874 = vmatpush1.msra.mxu0 0.0
    %875 = vmatprep.subr.mxu0 0.0
    %876 = vmatpush1.msra.mxu0 0.0
    %877 = vmatprep.subr.mxu0 0.0
    %878 = vmatpush1.msra.mxu0 0.0
    %879 = vmatprep.subr.mxu0 0.0
    %880 = vmatpush1.msra.mxu0 0.0
    %881 = vmatprep.subr.mxu0 0.0
    %882 = vmatpush1.msra.mxu0 0.0
    %883 = vmatprep.subr.mxu0 0.0
    %884 = vmatpush1.msra.mxu0 0.0
    %885 = vmatprep.mubr.f32.mxu0 0.0
    %v886 = vand.u32 %v55, 4294901760
    %887 = vmatmul.mubr.f32.gmra.mrb[0].mxu0 %v886
    %v888 = vpop.f32.mrb[0].mxu0
    %v889 = vadd.f32 %v721, %v888
    %v890 = vpop.f32.mrb[0].mxu0
    %v891 = vadd.f32 %v723, %v890
    %892 = vdwg.mxu0
    %v893 = vand.u32 %v57, 4294901760
    %894 = vmatprep.subr.mxu0 %v893
    %v895 = vand.u32 %v56, 4294901760
    %896 = vmatpush1.msra.mxu0 %v895
    %v897 = vand.u32 %v61, 4294901760
    %898 = vmatprep.subr.mxu0 %v897
    %v899 = vand.u32 %v60, 4294901760
    %900 = vmatpush1.msra.mxu0 %v899
    %v901 = vand.u32 %v65, 4294901760
    %902 = vmatprep.subr.mxu0 %v901
    %v903 = vand.u32 %v64, 4294901760
    %904 = vmatpush1.msra.mxu0 %v903
    %v905 = vand.u32 %v69, 4294901760
    %906 = vmatprep.subr.mxu0 %v905
    %v907 = vand.u32 %v68, 4294901760
    %908 = vmatpush1.msra.mxu0 %v907
    %v909 = vand.u32 %v73, 4294901760
    %910 = vmatprep.subr.mxu0 %v909
    %v911 = vand.u32 %v72, 4294901760
    %912 = vmatpush1.msra.mxu0 %v911
    %v913 = vand.u32 %v77, 4294901760
    %914 = vmatprep.subr.mxu0 %v913
    %v915 = vand.u32 %v76, 4294901760
    %916 = vmatpush1.msra.mxu0 %v915
    %v917 = vand.u32 %v81, 4294901760
    %918 = vmatprep.subr.mxu0 %v917
    %v919 = vand.u32 %v80, 4294901760
    %920 = vmatpush1.msra.mxu0 %v919
    %v921 = vand.u32 %v85, 4294901760
    %922 = vmatprep.subr.mxu0 %v921
    %v923 = vand.u32 %v84, 4294901760
    %924 = vmatpush1.msra.mxu0 %v923
    %v925 = vand.u32 %v89, 4294901760
    %926 = vmatprep.subr.mxu0 %v925
    %v927 = vand.u32 %v88, 4294901760
    %928 = vmatpush1.msra.mxu0 %v927
    %v929 = vand.u32 %v93, 4294901760
    %930 = vmatprep.subr.mxu0 %v929
    %v931 = vand.u32 %v92, 4294901760
    %932 = vmatpush1.msra.mxu0 %v931
    %v933 = vand.u32 %v97, 4294901760
    %934 = vmatprep.subr.mxu0 %v933
    %v935 = vand.u32 %v96, 4294901760
    %936 = vmatpush1.msra.mxu0 %v935
    %v937 = vand.u32 %v101, 4294901760
    %938 = vmatprep.subr.mxu0 %v937
    %v939 = vand.u32 %v100, 4294901760
    %940 = vmatpush1.msra.mxu0 %v939
    %v941 = vand.u32 %v105, 4294901760
    %942 = vmatprep.subr.mxu0 %v941
    %v943 = vand.u32 %v104, 4294901760
    %944 = vmatpush1.msra.mxu0 %v943
    %v945 = vand.u32 %v109, 4294901760
    %946 = vmatprep.subr.mxu0 %v945
    %v947 = vand.u32 %v108, 4294901760
    %948 = vmatpush1.msra.mxu0 %v947
    %v949 = vand.u32 %v113, 4294901760
    %950 = vmatprep.subr.mxu0 %v949
    %v951 = vand.u32 %v112, 4294901760
    %952 = vmatpush1.msra.mxu0 %v951
    %v953 = vand.u32 %v117, 4294901760
    %954 = vmatprep.subr.mxu0 %v953
    %v955 = vand.u32 %v116, 4294901760
    %956 = vmatpush1.msra.mxu0 %v955
    %957 = vmatprep.subr.mxu0 0.0
    %958 = vmatpush1.msra.mxu0 0.0
    %959 = vmatprep.subr.mxu0 0.0
    %960 = vmatpush1.msra.mxu0 0.0
    %961 = vmatprep.subr.mxu0 0.0
    %962 = vmatpush1.msra.mxu0 0.0
    %963 = vmatprep.subr.mxu0 0.0
    %964 = vmatpush1.msra.mxu0 0.0
    %965 = vmatprep.subr.mxu0 0.0
    %966 = vmatpush1.msra.mxu0 0.0
    %967 = vmatprep.subr.mxu0 0.0
    %968 = vmatpush1.msra.mxu0 0.0
    %969 = vmatprep.subr.mxu0 0.0
    %970 = vmatpush1.msra.mxu0 0.0
    %971 = vmatprep.subr.mxu0 0.0
    %972 = vmatpush1.msra.mxu0 0.0
    %973 = vmatprep.subr.mxu0 0.0
    %974 = vmatpush1.msra.mxu0 0.0
    %975 = vmatprep.subr.mxu0 0.0
    %976 = vmatpush1.msra.mxu0 0.0
    %977 = vmatprep.subr.mxu0 0.0
    %978 = vmatpush1.msra.mxu0 0.0
    %979 = vmatprep.subr.mxu0 0.0
    %980 = vmatpush1.msra.mxu0 0.0
    %981 = vmatprep.subr.mxu0 0.0
    %982 = vmatpush1.msra.mxu0 0.0
    %983 = vmatprep.subr.mxu0 0.0
    %984 = vmatpush1.msra.mxu0 0.0
    %985 = vmatprep.subr.mxu0 0.0
    %986 = vmatpush1.msra.mxu0 0.0
    %987 = vmatprep.subr.mxu0 0.0
    %988 = vmatpush1.msra.mxu0 0.0
    %989 = vmatprep.mubr.f32.mxu0 0.0
    %v990 = vand.u32 %v55, 4294901760
    %991 = vmatmul.mubr.f32.gmra.mrb[0].mxu0 %v990
    %v992 = vpop.f32.mrb[0].mxu0
    %v993 = vadd.f32 %v889, %v992
    %v994 = vpop.f32.mrb[0].mxu0
    %v995 = vadd.f32 %v891, %v994
    %996 = vdwg.mxu0
    %v997 = vand.u32 %v59, 4294901760
    %998 = vmatprep.subr.mxu0 %v997
    %v999 = vand.u32 %v58, 4294901760
    %1000 = vmatpush1.msra.mxu0 %v999
    %v1001 = vand.u32 %v63, 4294901760
    %1002 = vmatprep.subr.mxu0 %v1001
    %v1003 = vand.u32 %v62, 4294901760
    %1004 = vmatpush1.msra.mxu0 %v1003
    %v1005 = vand.u32 %v67, 4294901760
    %1006 = vmatprep.subr.mxu0 %v1005
    %v1007 = vand.u32 %v66, 4294901760
    %1008 = vmatpush1.msra.mxu0 %v1007
    %v1009 = vand.u32 %v71, 4294901760
    %1010 = vmatprep.subr.mxu0 %v1009
    %v1011 = vand.u32 %v70, 4294901760
    %1012 = vmatpush1.msra.mxu0 %v1011
    %v1013 = vand.u32 %v75, 4294901760
    %1014 = vmatprep.subr.mxu0 %v1013
    %v1015 = vand.u32 %v74, 4294901760
    %1016 = vmatpush1.msra.mxu0 %v1015
    %v1017 = vand.u32 %v79, 4294901760
    %1018 = vmatprep.subr.mxu0 %v1017
    %v1019 = vand.u32 %v78, 4294901760
    %1020 = vmatpush1.msra.mxu0 %v1019
    %v1021 = vand.u32 %v83, 4294901760
    %1022 = vmatprep.subr.mxu0 %v1021
    %v1023 = vand.u32 %v82, 4294901760
    %1024 = vmatpush1.msra.mxu0 %v1023
    %v1025 = vand.u32 %v87, 4294901760
    %1026 = vmatprep.subr.mxu0 %v1025
    %v1027 = vand.u32 %v86, 4294901760
    %1028 = vmatpush1.msra.mxu0 %v1027
    %v1029 = vand.u32 %v91, 4294901760
    %1030 = vmatprep.subr.mxu0 %v1029
    %v1031 = vand.u32 %v90, 4294901760
    %1032 = vmatpush1.msra.mxu0 %v1031
    %v1033 = vand.u32 %v95, 4294901760
    %1034 = vmatprep.subr.mxu0 %v1033
    %v1035 = vand.u32 %v94, 4294901760
    %1036 = vmatpush1.msra.mxu0 %v1035
    %v1037 = vand.u32 %v99, 4294901760
    %1038 = vmatprep.subr.mxu0 %v1037
    %v1039 = vand.u32 %v98, 4294901760
    %1040 = vmatpush1.msra.mxu0 %v1039
    %v1041 = vand.u32 %v103, 4294901760
    %1042 = vmatprep.subr.mxu0 %v1041
    %v1043 = vand.u32 %v102, 4294901760
    %1044 = vmatpush1.msra.mxu0 %v1043
    %v1045 = vand.u32 %v107, 4294901760
    %1046 = vmatprep.subr.mxu0 %v1045
    %v1047 = vand.u32 %v106, 4294901760
    %1048 = vmatpush1.msra.mxu0 %v1047
    %v1049 = vand.u32 %v111, 4294901760
    %1050 = vmatprep.subr.mxu0 %v1049
    %v1051 = vand.u32 %v110, 4294901760
    %1052 = vmatpush1.msra.mxu0 %v1051
    %v1053 = vand.u32 %v115, 4294901760
    %1054 = vmatprep.subr.mxu0 %v1053
    %v1055 = vand.u32 %v114, 4294901760
    %1056 = vmatpush1.msra.mxu0 %v1055
    %v1057 = vand.u32 %v119, 4294901760
    %1058 = vmatprep.subr.mxu0 %v1057
    %v1059 = vand.u32 %v118, 4294901760
    %1060 = vmatpush1.msra.mxu0 %v1059
    %1061 = vmatprep.subr.mxu0 0.0
    %1062 = vmatpush1.msra.mxu0 0.0
    %1063 = vmatprep.subr.mxu0 0.0
    %1064 = vmatpush1.msra.mxu0 0.0
    %1065 = vmatprep.subr.mxu0 0.0
    %1066 = vmatpush1.msra.mxu0 0.0
    %1067 = vmatprep.subr.mxu0 0.0
    %1068 = vmatpush1.msra.mxu0 0.0
    %1069 = vmatprep.subr.mxu0 0.0
    %1070 = vmatpush1.msra.mxu0 0.0
    %1071 = vmatprep.subr.mxu0 0.0
    %1072 = vmatpush1.msra.mxu0 0.0
    %1073 = vmatprep.subr.mxu0 0.0
    %1074 = vmatpush1.msra.mxu0 0.0
    %1075 = vmatprep.subr.mxu0 0.0
    %1076 = vmatpush1.msra.mxu0 0.0
    %1077 = vmatprep.subr.mxu0 0.0
    %1078 = vmatpush1.msra.mxu0 0.0
    %1079 = vmatprep.subr.mxu0 0.0
    %1080 = vmatpush1.msra.mxu0 0.0
    %1081 = vmatprep.subr.mxu0 0.0
    %1082 = vmatpush1.msra.mxu0 0.0
    %1083 = vmatprep.subr.mxu0 0.0
    %1084 = vmatpush1.msra.mxu0 0.0
    %1085 = vmatprep.subr.mxu0 0.0
    %1086 = vmatpush1.msra.mxu0 0.0
    %1087 = vmatprep.subr.mxu0 0.0
    %1088 = vmatpush1.msra.mxu0 0.0
    %1089 = vmatprep.subr.mxu0 0.0
    %1090 = vmatpush1.msra.mxu0 0.0
    %1091 = vmatprep.subr.mxu0 0.0
    %1092 = vmatpush1.msra.mxu0 0.0
    %1093 = vmatprep.mubr.f32.mxu0 0.0
    %v1094 = vand.u32 %v55, 4294901760
    %v1095 = vsub.f32 %v55, %v1094
    %v1096 = vand.u32 %v1095, 4294901760
    %v1097 = vsub.f32 %v1095, %v1096
    %v1098 = vand.u32 %v1097, 4294901760
    %1099 = vmatmul.mubr.f32.gmra.mrb[0].mxu0 %v1098
    %v1100 = vpop.f32.mrb[0].mxu0
    %v1101 = vadd.f32 %v133, %v1100
    %v1102 = vpop.f32.mrb[0].mxu0
    %v1103 = vadd.f32 %v137, %v1102
    %1104 = vdwg.mxu0
    %v1105 = vand.u32 %v59, 4294901760
    %v1106 = vsub.f32 %v59, %v1105
    %v1107 = vand.u32 %v1106, 4294901760
    %v1108 = vsub.f32 %v1106, %v1107
    %v1109 = vand.u32 %v1108, 4294901760
    %1110 = vmatprep.subr.mxu0 %v1109
    %v1111 = vand.u32 %v58, 4294901760
    %v1112 = vsub.f32 %v58, %v1111
    %v1113 = vand.u32 %v1112, 4294901760
    %v1114 = vsub.f32 %v1112, %v1113
    %v1115 = vand.u32 %v1114, 4294901760
    %1116 = vmatpush1.msra.mxu0 %v1115
    %v1117 = vand.u32 %v63, 4294901760
    %v1118 = vsub.f32 %v63, %v1117
    %v1119 = vand.u32 %v1118, 4294901760
    %v1120 = vsub.f32 %v1118, %v1119
    %v1121 = vand.u32 %v1120, 4294901760
    %1122 = vmatprep.subr.mxu0 %v1121
    %v1123 = vand.u32 %v62, 4294901760
    %v1124 = vsub.f32 %v62, %v1123
    %v1125 = vand.u32 %v1124, 4294901760
    %v1126 = vsub.f32 %v1124, %v1125
    %v1127 = vand.u32 %v1126, 4294901760
    %1128 = vmatpush1.msra.mxu0 %v1127
    %v1129 = vand.u32 %v67, 4294901760
    %v1130 = vsub.f32 %v67, %v1129
    %v1131 = vand.u32 %v1130, 4294901760
    %v1132 = vsub.f32 %v1130, %v1131
    %v1133 = vand.u32 %v1132, 4294901760
    %1134 = vmatprep.subr.mxu0 %v1133
    %v1135 = vand.u32 %v66, 4294901760
    %v1136 = vsub.f32 %v66, %v1135
    %v1137 = vand.u32 %v1136, 4294901760
    %v1138 = vsub.f32 %v1136, %v1137
    %v1139 = vand.u32 %v1138, 4294901760
    %1140 = vmatpush1.msra.mxu0 %v1139
    %v1141 = vand.u32 %v71, 4294901760
    %v1142 = vsub.f32 %v71, %v1141
    %v1143 = vand.u32 %v1142, 4294901760
    %v1144 = vsub.f32 %v1142, %v1143
    %v1145 = vand.u32 %v1144, 4294901760
    %1146 = vmatprep.subr.mxu0 %v1145
    %v1147 = vand.u32 %v70, 4294901760
    %v1148 = vsub.f32 %v70, %v1147
    %v1149 = vand.u32 %v1148, 4294901760
    %v1150 = vsub.f32 %v1148, %v1149
    %v1151 = vand.u32 %v1150, 4294901760
    %1152 = vmatpush1.msra.mxu0 %v1151
    %v1153 = vand.u32 %v75, 4294901760
    %v1154 = vsub.f32 %v75, %v1153
    %v1155 = vand.u32 %v1154, 4294901760
    %v1156 = vsub.f32 %v1154, %v1155
    %v1157 = vand.u32 %v1156, 4294901760
    %1158 = vmatprep.subr.mxu0 %v1157
    %v1159 = vand.u32 %v74, 4294901760
    %v1160 = vsub.f32 %v74, %v1159
    %v1161 = vand.u32 %v1160, 4294901760
    %v1162 = vsub.f32 %v1160, %v1161
    %v1163 = vand.u32 %v1162, 4294901760
    %1164 = vmatpush1.msra.mxu0 %v1163
    %v1165 = vand.u32 %v79, 4294901760
    %v1166 = vsub.f32 %v79, %v1165
    %v1167 = vand.u32 %v1166, 4294901760
    %v1168 = vsub.f32 %v1166, %v1167
    %v1169 = vand.u32 %v1168, 4294901760
    %1170 = vmatprep.subr.mxu0 %v1169
    %v1171 = vand.u32 %v78, 4294901760
    %v1172 = vsub.f32 %v78, %v1171
    %v1173 = vand.u32 %v1172, 4294901760
    %v1174 = vsub.f32 %v1172, %v1173
    %v1175 = vand.u32 %v1174, 4294901760
    %1176 = vmatpush1.msra.mxu0 %v1175
    %v1177 = vand.u32 %v83, 4294901760
    %v1178 = vsub.f32 %v83, %v1177
    %v1179 = vand.u32 %v1178, 4294901760
    %v1180 = vsub.f32 %v1178, %v1179
    %v1181 = vand.u32 %v1180, 4294901760
    %1182 = vmatprep.subr.mxu0 %v1181
    %v1183 = vand.u32 %v82, 4294901760
    %v1184 = vsub.f32 %v82, %v1183
    %v1185 = vand.u32 %v1184, 4294901760
    %v1186 = vsub.f32 %v1184, %v1185
    %v1187 = vand.u32 %v1186, 4294901760
    %1188 = vmatpush1.msra.mxu0 %v1187
    %v1189 = vand.u32 %v87, 4294901760
    %v1190 = vsub.f32 %v87, %v1189
    %v1191 = vand.u32 %v1190, 4294901760
    %v1192 = vsub.f32 %v1190, %v1191
    %v1193 = vand.u32 %v1192, 4294901760
    %1194 = vmatprep.subr.mxu0 %v1193
    %v1195 = vand.u32 %v86, 4294901760
    %v1196 = vsub.f32 %v86, %v1195
    %v1197 = vand.u32 %v1196, 4294901760
    %v1198 = vsub.f32 %v1196, %v1197
    %v1199 = vand.u32 %v1198, 4294901760
    %1200 = vmatpush1.msra.mxu0 %v1199
    %v1201 = vand.u32 %v91, 4294901760
    %v1202 = vsub.f32 %v91, %v1201
    %v1203 = vand.u32 %v1202, 4294901760
    %v1204 = vsub.f32 %v1202, %v1203
    %v1205 = vand.u32 %v1204, 4294901760
    %1206 = vmatprep.subr.mxu0 %v1205
    %v1207 = vand.u32 %v90, 4294901760
    %v1208 = vsub.f32 %v90, %v1207
    %v1209 = vand.u32 %v1208, 4294901760
    %v1210 = vsub.f32 %v1208, %v1209
    %v1211 = vand.u32 %v1210, 4294901760
    %1212 = vmatpush1.msra.mxu0 %v1211
    %v1213 = vand.u32 %v95, 4294901760
    %v1214 = vsub.f32 %v95, %v1213
    %v1215 = vand.u32 %v1214, 4294901760
    %v1216 = vsub.f32 %v1214, %v1215
    %v1217 = vand.u32 %v1216, 4294901760
    %1218 = vmatprep.subr.mxu0 %v1217
    %v1219 = vand.u32 %v94, 4294901760
    %v1220 = vsub.f32 %v94, %v1219
    %v1221 = vand.u32 %v1220, 4294901760
    %v1222 = vsub.f32 %v1220, %v1221
    %v1223 = vand.u32 %v1222, 4294901760
    %1224 = vmatpush1.msra.mxu0 %v1223
    %v1225 = vand.u32 %v99, 4294901760
    %v1226 = vsub.f32 %v99, %v1225
    %v1227 = vand.u32 %v1226, 4294901760
    %v1228 = vsub.f32 %v1226, %v1227
    %v1229 = vand.u32 %v1228, 4294901760
    %1230 = vmatprep.subr.mxu0 %v1229
    %v1231 = vand.u32 %v98, 4294901760
    %v1232 = vsub.f32 %v98, %v1231
    %v1233 = vand.u32 %v1232, 4294901760
    %v1234 = vsub.f32 %v1232, %v1233
    %v1235 = vand.u32 %v1234, 4294901760
    %1236 = vmatpush1.msra.mxu0 %v1235
    %v1237 = vand.u32 %v103, 4294901760
    %v1238 = vsub.f32 %v103, %v1237
    %v1239 = vand.u32 %v1238, 4294901760
    %v1240 = vsub.f32 %v1238, %v1239
    %v1241 = vand.u32 %v1240, 4294901760
    %1242 = vmatprep.subr.mxu0 %v1241
    %v1243 = vand.u32 %v102, 4294901760
    %v1244 = vsub.f32 %v102, %v1243
    %v1245 = vand.u32 %v1244, 4294901760
    %v1246 = vsub.f32 %v1244, %v1245
    %v1247 = vand.u32 %v1246, 4294901760
    %1248 = vmatpush1.msra.mxu0 %v1247
    %v1249 = vand.u32 %v107, 4294901760
    %v1250 = vsub.f32 %v107, %v1249
    %v1251 = vand.u32 %v1250, 4294901760
    %v1252 = vsub.f32 %v1250, %v1251
    %v1253 = vand.u32 %v1252, 4294901760
    %1254 = vmatprep.subr.mxu0 %v1253
    %v1255 = vand.u32 %v106, 4294901760
    %v1256 = vsub.f32 %v106, %v1255
    %v1257 = vand.u32 %v1256, 4294901760
    %v1258 = vsub.f32 %v1256, %v1257
    %v1259 = vand.u32 %v1258, 4294901760
    %1260 = vmatpush1.msra.mxu0 %v1259
    %v1261 = vand.u32 %v111, 4294901760
    %v1262 = vsub.f32 %v111, %v1261
    %v1263 = vand.u32 %v1262, 4294901760
    %v1264 = vsub.f32 %v1262, %v1263
    %v1265 = vand.u32 %v1264, 4294901760
    %1266 = vmatprep.subr.mxu0 %v1265
    %v1267 = vand.u32 %v110, 4294901760
    %v1268 = vsub.f32 %v110, %v1267
    %v1269 = vand.u32 %v1268, 4294901760
    %v1270 = vsub.f32 %v1268, %v1269
    %v1271 = vand.u32 %v1270, 4294901760
    %1272 = vmatpush1.msra.mxu0 %v1271
    %v1273 = vand.u32 %v115, 4294901760
    %v1274 = vsub.f32 %v115, %v1273
    %v1275 = vand.u32 %v1274, 4294901760
    %v1276 = vsub.f32 %v1274, %v1275
    %v1277 = vand.u32 %v1276, 4294901760
    %1278 = vmatprep.subr.mxu0 %v1277
    %v1279 = vand.u32 %v114, 4294901760
    %v1280 = vsub.f32 %v114, %v1279
    %v1281 = vand.u32 %v1280, 4294901760
    %v1282 = vsub.f32 %v1280, %v1281
    %v1283 = vand.u32 %v1282, 4294901760
    %1284 = vmatpush1.msra.mxu0 %v1283
    %v1285 = vand.u32 %v119, 4294901760
    %v1286 = vsub.f32 %v119, %v1285
    %v1287 = vand.u32 %v1286, 4294901760
    %v1288 = vsub.f32 %v1286, %v1287
    %v1289 = vand.u32 %v1288, 4294901760
    %1290 = vmatprep.subr.mxu0 %v1289
    %v1291 = vand.u32 %v118, 4294901760
    %v1292 = vsub.f32 %v118, %v1291
    %v1293 = vand.u32 %v1292, 4294901760
    %v1294 = vsub.f32 %v1292, %v1293
    %v1295 = vand.u32 %v1294, 4294901760
    %1296 = vmatpush1.msra.mxu0 %v1295
    %1297 = vmatprep.subr.mxu0 0.0
    %1298 = vmatpush1.msra.mxu0 0.0
    %1299 = vmatprep.subr.mxu0 0.0
    %1300 = vmatpush1.msra.mxu0 0.0
    %1301 = vmatprep.subr.mxu0 0.0
    %1302 = vmatpush1.msra.mxu0 0.0
    %1303 = vmatprep.subr.mxu0 0.0
    %1304 = vmatpush1.msra.mxu0 0.0
    %1305 = vmatprep.subr.mxu0 0.0
    %1306 = vmatpush1.msra.mxu0 0.0
    %1307 = vmatprep.subr.mxu0 0.0
    %1308 = vmatpush1.msra.mxu0 0.0
    %1309 = vmatprep.subr.mxu0 0.0
    %1310 = vmatpush1.msra.mxu0 0.0
    %1311 = vmatprep.subr.mxu0 0.0
    %1312 = vmatpush1.msra.mxu0 0.0
    %1313 = vmatprep.subr.mxu0 0.0
    %1314 = vmatpush1.msra.mxu0 0.0
    %1315 = vmatprep.subr.mxu0 0.0
    %1316 = vmatpush1.msra.mxu0 0.0
    %1317 = vmatprep.subr.mxu0 0.0
    %1318 = vmatpush1.msra.mxu0 0.0
    %1319 = vmatprep.subr.mxu0 0.0
    %1320 = vmatpush1.msra.mxu0 0.0
    %1321 = vmatprep.subr.mxu0 0.0
    %1322 = vmatpush1.msra.mxu0 0.0
    %1323 = vmatprep.subr.mxu0 0.0
    %1324 = vmatpush1.msra.mxu0 0.0
    %1325 = vmatprep.subr.mxu0 0.0
    %1326 = vmatpush1.msra.mxu0 0.0
    %1327 = vmatprep.subr.mxu0 0.0
    %1328 = vmatpush1.msra.mxu0 0.0
    %1329 = vmatprep.mubr.f32.mxu0 0.0
    %v1330 = vand.u32 %v55, 4294901760
    %1331 = vmatmul.mubr.f32.gmra.mrb[0].mxu0 %v1330
    %v1332 = vpop.f32.mrb[0].mxu0
    %v1333 = vadd.f32 %v1101, %v1332
    %v1334 = vpop.f32.mrb[0].mxu0
    %v1335 = vadd.f32 %v1103, %v1334
    %1336 = vdwg.mxu0
    %v1337 = vand.u32 %v59, 4294901760
    %v1338 = vsub.f32 %v59, %v1337
    %1339 = vmatprep.subr.mxu0 %v1338
    %v1340 = vand.u32 %v58, 4294901760
    %v1341 = vsub.f32 %v58, %v1340
    %1342 = vmatpush1.msra.mxu0 %v1341
    %v1343 = vand.u32 %v63, 4294901760
    %v1344 = vsub.f32 %v63, %v1343
    %1345 = vmatprep.subr.mxu0 %v1344
    %v1346 = vand.u32 %v62, 4294901760
    %v1347 = vsub.f32 %v62, %v1346
    %1348 = vmatpush1.msra.mxu0 %v1347
    %v1349 = vand.u32 %v67, 4294901760
    %v1350 = vsub.f32 %v67, %v1349
    %1351 = vmatprep.subr.mxu0 %v1350
    %v1352 = vand.u32 %v66, 4294901760
    %v1353 = vsub.f32 %v66, %v1352
    %1354 = vmatpush1.msra.mxu0 %v1353
    %v1355 = vand.u32 %v71, 4294901760
    %v1356 = vsub.f32 %v71, %v1355
    %1357 = vmatprep.subr.mxu0 %v1356
    %v1358 = vand.u32 %v70, 4294901760
    %v1359 = vsub.f32 %v70, %v1358
    %1360 = vmatpush1.msra.mxu0 %v1359
    %v1361 = vand.u32 %v75, 4294901760
    %v1362 = vsub.f32 %v75, %v1361
    %1363 = vmatprep.subr.mxu0 %v1362
    %v1364 = vand.u32 %v74, 4294901760
    %v1365 = vsub.f32 %v74, %v1364
    %1366 = vmatpush1.msra.mxu0 %v1365
    %v1367 = vand.u32 %v79, 4294901760
    %v1368 = vsub.f32 %v79, %v1367
    %1369 = vmatprep.subr.mxu0 %v1368
    %v1370 = vand.u32 %v78, 4294901760
    %v1371 = vsub.f32 %v78, %v1370
    %1372 = vmatpush1.msra.mxu0 %v1371
    %v1373 = vand.u32 %v83, 4294901760
    %v1374 = vsub.f32 %v83, %v1373
    %1375 = vmatprep.subr.mxu0 %v1374
    %v1376 = vand.u32 %v82, 4294901760
    %v1377 = vsub.f32 %v82, %v1376
    %1378 = vmatpush1.msra.mxu0 %v1377
    %v1379 = vand.u32 %v87, 4294901760
    %v1380 = vsub.f32 %v87, %v1379
    %1381 = vmatprep.subr.mxu0 %v1380
    %v1382 = vand.u32 %v86, 4294901760
    %v1383 = vsub.f32 %v86, %v1382
    %1384 = vmatpush1.msra.mxu0 %v1383
    %v1385 = vand.u32 %v91, 4294901760
    %v1386 = vsub.f32 %v91, %v1385
    %1387 = vmatprep.subr.mxu0 %v1386
    %v1388 = vand.u32 %v90, 4294901760
    %v1389 = vsub.f32 %v90, %v1388
    %1390 = vmatpush1.msra.mxu0 %v1389
    %v1391 = vand.u32 %v95, 4294901760
    %v1392 = vsub.f32 %v95, %v1391
    %1393 = vmatprep.subr.mxu0 %v1392
    %v1394 = vand.u32 %v94, 4294901760
    %v1395 = vsub.f32 %v94, %v1394
    %1396 = vmatpush1.msra.mxu0 %v1395
    %v1397 = vand.u32 %v99, 4294901760
    %v1398 = vsub.f32 %v99, %v1397
    %1399 = vmatprep.subr.mxu0 %v1398
    %v1400 = vand.u32 %v98, 4294901760
    %v1401 = vsub.f32 %v98, %v1400
    %1402 = vmatpush1.msra.mxu0 %v1401
    %v1403 = vand.u32 %v103, 4294901760
    %v1404 = vsub.f32 %v103, %v1403
    %1405 = vmatprep.subr.mxu0 %v1404
    %v1406 = vand.u32 %v102, 4294901760
    %v1407 = vsub.f32 %v102, %v1406
    %1408 = vmatpush1.msra.mxu0 %v1407
    %v1409 = vand.u32 %v107, 4294901760
    %v1410 = vsub.f32 %v107, %v1409
    %1411 = vmatprep.subr.mxu0 %v1410
    %v1412 = vand.u32 %v106, 4294901760
    %v1413 = vsub.f32 %v106, %v1412
    %1414 = vmatpush1.msra.mxu0 %v1413
    %v1415 = vand.u32 %v111, 4294901760
    %v1416 = vsub.f32 %v111, %v1415
    %1417 = vmatprep.subr.mxu0 %v1416
    %v1418 = vand.u32 %v110, 4294901760
    %v1419 = vsub.f32 %v110, %v1418
    %1420 = vmatpush1.msra.mxu0 %v1419
    %v1421 = vand.u32 %v115, 4294901760
    %v1422 = vsub.f32 %v115, %v1421
    %1423 = vmatprep.subr.mxu0 %v1422
    %v1424 = vand.u32 %v114, 4294901760
    %v1425 = vsub.f32 %v114, %v1424
    %1426 = vmatpush1.msra.mxu0 %v1425
    %v1427 = vand.u32 %v119, 4294901760
    %v1428 = vsub.f32 %v119, %v1427
    %1429 = vmatprep.subr.mxu0 %v1428
    %v1430 = vand.u32 %v118, 4294901760
    %v1431 = vsub.f32 %v118, %v1430
    %1432 = vmatpush1.msra.mxu0 %v1431
    %1433 = vmatprep.subr.mxu0 0.0
    %1434 = vmatpush1.msra.mxu0 0.0
    %1435 = vmatprep.subr.mxu0 0.0
    %1436 = vmatpush1.msra.mxu0 0.0
    %1437 = vmatprep.subr.mxu0 0.0
    %1438 = vmatpush1.msra.mxu0 0.0
    %1439 = vmatprep.subr.mxu0 0.0
    %1440 = vmatpush1.msra.mxu0 0.0
    %1441 = vmatprep.subr.mxu0 0.0
    %1442 = vmatpush1.msra.mxu0 0.0
    %1443 = vmatprep.subr.mxu0 0.0
    %1444 = vmatpush1.msra.mxu0 0.0
    %1445 = vmatprep.subr.mxu0 0.0
    %1446 = vmatpush1.msra.mxu0 0.0
    %1447 = vmatprep.subr.mxu0 0.0
    %1448 = vmatpush1.msra.mxu0 0.0
    %1449 = vmatprep.subr.mxu0 0.0
    %1450 = vmatpush1.msra.mxu0 0.0
    %1451 = vmatprep.subr.mxu0 0.0
    %1452 = vmatpush1.msra.mxu0 0.0
    %1453 = vmatprep.subr.mxu0 0.0
    %1454 = vmatpush1.msra.mxu0 0.0
    %1455 = vmatprep.subr.mxu0 0.0
    %1456 = vmatpush1.msra.mxu0 0.0
    %1457 = vmatprep.subr.mxu0 0.0
    %1458 = vmatpush1.msra.mxu0 0.0
    %1459 = vmatprep.subr.mxu0 0.0
    %1460 = vmatpush1.msra.mxu0 0.0
    %1461 = vmatprep.subr.mxu0 0.0
    %1462 = vmatpush1.msra.mxu0 0.0
    %1463 = vmatprep.subr.mxu0 0.0
    %1464 = vmatpush1.msra.mxu0 0.0
    %1465 = vmatprep.mubr.f32.mxu0 0.0
    %v1466 = vand.u32 %v55, 4294901760
    %v1467 = vsub.f32 %v55, %v1466
    %1468 = vmatmul.mubr.f32.gmra.mrb[0].mxu0 %v1467
    %v1469 = vpop.f32.mrb[0].mxu0
    %v1470 = vadd.f32 %v1333, %v1469
    %v1471 = vpop.f32.mrb[0].mxu0
    %v1472 = vadd.f32 %v1335, %v1471
    %1473 = vdwg.mxu0
    %v1474 = vand.u32 %v59, 4294901760
    %1475 = vmatprep.subr.mxu0 %v1474
    %v1476 = vand.u32 %v58, 4294901760
    %1477 = vmatpush1.msra.mxu0 %v1476
    %v1478 = vand.u32 %v63, 4294901760
    %1479 = vmatprep.subr.mxu0 %v1478
    %v1480 = vand.u32 %v62, 4294901760
    %1481 = vmatpush1.msra.mxu0 %v1480
    %v1482 = vand.u32 %v67, 4294901760
    %1483 = vmatprep.subr.mxu0 %v1482
    %v1484 = vand.u32 %v66, 4294901760
    %1485 = vmatpush1.msra.mxu0 %v1484
    %v1486 = vand.u32 %v71, 4294901760
    %1487 = vmatprep.subr.mxu0 %v1486
    %v1488 = vand.u32 %v70, 4294901760
    %1489 = vmatpush1.msra.mxu0 %v1488
    %v1490 = vand.u32 %v75, 4294901760
    %1491 = vmatprep.subr.mxu0 %v1490
    %v1492 = vand.u32 %v74, 4294901760
    %1493 = vmatpush1.msra.mxu0 %v1492
    %v1494 = vand.u32 %v79, 4294901760
    %1495 = vmatprep.subr.mxu0 %v1494
    %v1496 = vand.u32 %v78, 4294901760
    %1497 = vmatpush1.msra.mxu0 %v1496
    %v1498 = vand.u32 %v83, 4294901760
    %1499 = vmatprep.subr.mxu0 %v1498
    %v1500 = vand.u32 %v82, 4294901760
    %1501 = vmatpush1.msra.mxu0 %v1500
    %v1502 = vand.u32 %v87, 4294901760
    %1503 = vmatprep.subr.mxu0 %v1502
    %v1504 = vand.u32 %v86, 4294901760
    %1505 = vmatpush1.msra.mxu0 %v1504
    %v1506 = vand.u32 %v91, 4294901760
    %1507 = vmatprep.subr.mxu0 %v1506
    %v1508 = vand.u32 %v90, 4294901760
    %1509 = vmatpush1.msra.mxu0 %v1508
    %v1510 = vand.u32 %v95, 4294901760
    %1511 = vmatprep.subr.mxu0 %v1510
    %v1512 = vand.u32 %v94, 4294901760
    %1513 = vmatpush1.msra.mxu0 %v1512
    %v1514 = vand.u32 %v99, 4294901760
    %1515 = vmatprep.subr.mxu0 %v1514
    %v1516 = vand.u32 %v98, 4294901760
    %1517 = vmatpush1.msra.mxu0 %v1516
    %v1518 = vand.u32 %v103, 4294901760
    %1519 = vmatprep.subr.mxu0 %v1518
    %v1520 = vand.u32 %v102, 4294901760
    %1521 = vmatpush1.msra.mxu0 %v1520
    %v1522 = vand.u32 %v107, 4294901760
    %1523 = vmatprep.subr.mxu0 %v1522
    %v1524 = vand.u32 %v106, 4294901760
    %1525 = vmatpush1.msra.mxu0 %v1524
    %v1526 = vand.u32 %v111, 4294901760
    %1527 = vmatprep.subr.mxu0 %v1526
    %v1528 = vand.u32 %v110, 4294901760
    %1529 = vmatpush1.msra.mxu0 %v1528
    %v1530 = vand.u32 %v115, 4294901760
    %1531 = vmatprep.subr.mxu0 %v1530
    %v1532 = vand.u32 %v114, 4294901760
    %1533 = vmatpush1.msra.mxu0 %v1532
    %v1534 = vand.u32 %v119, 4294901760
    %1535 = vmatprep.subr.mxu0 %v1534
    %v1536 = vand.u32 %v118, 4294901760
    %1537 = vmatpush1.msra.mxu0 %v1536
    %1538 = vmatprep.subr.mxu0 0.0
    %1539 = vmatpush1.msra.mxu0 0.0
    %1540 = vmatprep.subr.mxu0 0.0
    %1541 = vmatpush1.msra.mxu0 0.0
    %1542 = vmatprep.subr.mxu0 0.0
    %1543 = vmatpush1.msra.mxu0 0.0
    %1544 = vmatprep.subr.mxu0 0.0
    %1545 = vmatpush1.msra.mxu0 0.0
    %1546 = vmatprep.subr.mxu0 0.0
    %1547 = vmatpush1.msra.mxu0 0.0
    %1548 = vmatprep.subr.mxu0 0.0
    %1549 = vmatpush1.msra.mxu0 0.0
    %1550 = vmatprep.subr.mxu0 0.0
    %1551 = vmatpush1.msra.mxu0 0.0
    %1552 = vmatprep.subr.mxu0 0.0
    %1553 = vmatpush1.msra.mxu0 0.0
    %1554 = vmatprep.subr.mxu0 0.0
    %1555 = vmatpush1.msra.mxu0 0.0
    %1556 = vmatprep.subr.mxu0 0.0
    %1557 = vmatpush1.msra.mxu0 0.0
    %1558 = vmatprep.subr.mxu0 0.0
    %1559 = vmatpush1.msra.mxu0 0.0
    %1560 = vmatprep.subr.mxu0 0.0
    %1561 = vmatpush1.msra.mxu0 0.0
    %1562 = vmatprep.subr.mxu0 0.0
    %1563 = vmatpush1.msra.mxu0 0.0
    %1564 = vmatprep.subr.mxu0 0.0
    %1565 = vmatpush1.msra.mxu0 0.0
    %1566 = vmatprep.subr.mxu0 0.0
    %1567 = vmatpush1.msra.mxu0 0.0
    %1568 = vmatprep.subr.mxu0 0.0
    %1569 = vmatpush1.msra.mxu0 0.0
    %1570 = vmatprep.mubr.f32.mxu0 0.0
    %v1571 = vand.u32 %v55, 4294901760
    %v1572 = vsub.f32 %v55, %v1571
    %v1573 = vand.u32 %v1572, 4294901760
    %1574 = vmatmul.mubr.f32.gmra.mrb[0].mxu0 %v1573
    %v1575 = vpop.f32.mrb[0].mxu0
    %v1576 = vadd.f32 %v1470, %v1575
    %v1577 = vpop.f32.mrb[0].mxu0
    %v1578 = vadd.f32 %v1472, %v1577
    %1579 = vdwg.mxu0
    %v1580 = vand.u32 %v59, 4294901760
    %v1581 = vsub.f32 %v59, %v1580
    %v1582 = vand.u32 %v1581, 4294901760
    %1583 = vmatprep.subr.mxu0 %v1582
    %v1584 = vand.u32 %v58, 4294901760
    %v1585 = vsub.f32 %v58, %v1584
    %v1586 = vand.u32 %v1585, 4294901760
    %1587 = vmatpush1.msra.mxu0 %v1586
    %v1588 = vand.u32 %v63, 4294901760
    %v1589 = vsub.f32 %v63, %v1588
    %v1590 = vand.u32 %v1589, 4294901760
    %1591 = vmatprep.subr.mxu0 %v1590
    %v1592 = vand.u32 %v62, 4294901760
    %v1593 = vsub.f32 %v62, %v1592
    %v1594 = vand.u32 %v1593, 4294901760
    %1595 = vmatpush1.msra.mxu0 %v1594
    %v1596 = vand.u32 %v67, 4294901760
    %v1597 = vsub.f32 %v67, %v1596
    %v1598 = vand.u32 %v1597, 4294901760
    %1599 = vmatprep.subr.mxu0 %v1598
    %v1600 = vand.u32 %v66, 4294901760
    %v1601 = vsub.f32 %v66, %v1600
    %v1602 = vand.u32 %v1601, 4294901760
    %1603 = vmatpush1.msra.mxu0 %v1602
    %v1604 = vand.u32 %v71, 4294901760
    %v1605 = vsub.f32 %v71, %v1604
    %v1606 = vand.u32 %v1605, 4294901760
    %1607 = vmatprep.subr.mxu0 %v1606
    %v1608 = vand.u32 %v70, 4294901760
    %v1609 = vsub.f32 %v70, %v1608
    %v1610 = vand.u32 %v1609, 4294901760
    %1611 = vmatpush1.msra.mxu0 %v1610
    %v1612 = vand.u32 %v75, 4294901760
    %v1613 = vsub.f32 %v75, %v1612
    %v1614 = vand.u32 %v1613, 4294901760
    %1615 = vmatprep.subr.mxu0 %v1614
    %v1616 = vand.u32 %v74, 4294901760
    %v1617 = vsub.f32 %v74, %v1616
    %v1618 = vand.u32 %v1617, 4294901760
    %1619 = vmatpush1.msra.mxu0 %v1618
    %v1620 = vand.u32 %v79, 4294901760
    %v1621 = vsub.f32 %v79, %v1620
    %v1622 = vand.u32 %v1621, 4294901760
    %1623 = vmatprep.subr.mxu0 %v1622
    %v1624 = vand.u32 %v78, 4294901760
    %v1625 = vsub.f32 %v78, %v1624
    %v1626 = vand.u32 %v1625, 4294901760
    %1627 = vmatpush1.msra.mxu0 %v1626
    %v1628 = vand.u32 %v83, 4294901760
    %v1629 = vsub.f32 %v83, %v1628
    %v1630 = vand.u32 %v1629, 4294901760
    %1631 = vmatprep.subr.mxu0 %v1630
    %v1632 = vand.u32 %v82, 4294901760
    %v1633 = vsub.f32 %v82, %v1632
    %v1634 = vand.u32 %v1633, 4294901760
    %1635 = vmatpush1.msra.mxu0 %v1634
    %v1636 = vand.u32 %v87, 4294901760
    %v1637 = vsub.f32 %v87, %v1636
    %v1638 = vand.u32 %v1637, 4294901760
    %1639 = vmatprep.subr.mxu0 %v1638
    %v1640 = vand.u32 %v86, 4294901760
    %v1641 = vsub.f32 %v86, %v1640
    %v1642 = vand.u32 %v1641, 4294901760
    %1643 = vmatpush1.msra.mxu0 %v1642
    %v1644 = vand.u32 %v91, 4294901760
    %v1645 = vsub.f32 %v91, %v1644
    %v1646 = vand.u32 %v1645, 4294901760
    %1647 = vmatprep.subr.mxu0 %v1646
    %v1648 = vand.u32 %v90, 4294901760
    %v1649 = vsub.f32 %v90, %v1648
    %v1650 = vand.u32 %v1649, 4294901760
    %1651 = vmatpush1.msra.mxu0 %v1650
    %v1652 = vand.u32 %v95, 4294901760
    %v1653 = vsub.f32 %v95, %v1652
    %v1654 = vand.u32 %v1653, 4294901760
    %1655 = vmatprep.subr.mxu0 %v1654
    %v1656 = vand.u32 %v94, 4294901760
    %v1657 = vsub.f32 %v94, %v1656
    %v1658 = vand.u32 %v1657, 4294901760
    %1659 = vmatpush1.msra.mxu0 %v1658
    %v1660 = vand.u32 %v99, 4294901760
    %v1661 = vsub.f32 %v99, %v1660
    %v1662 = vand.u32 %v1661, 4294901760
    %1663 = vmatprep.subr.mxu0 %v1662
    %v1664 = vand.u32 %v98, 4294901760
    %v1665 = vsub.f32 %v98, %v1664
    %v1666 = vand.u32 %v1665, 4294901760
    %1667 = vmatpush1.msra.mxu0 %v1666
    %v1668 = vand.u32 %v103, 4294901760
    %v1669 = vsub.f32 %v103, %v1668
    %v1670 = vand.u32 %v1669, 4294901760
    %1671 = vmatprep.subr.mxu0 %v1670
    %v1672 = vand.u32 %v102, 4294901760
    %v1673 = vsub.f32 %v102, %v1672
    %v1674 = vand.u32 %v1673, 4294901760
    %1675 = vmatpush1.msra.mxu0 %v1674
    %v1676 = vand.u32 %v107, 4294901760
    %v1677 = vsub.f32 %v107, %v1676
    %v1678 = vand.u32 %v1677, 4294901760
    %1679 = vmatprep.subr.mxu0 %v1678
    %v1680 = vand.u32 %v106, 4294901760
    %v1681 = vsub.f32 %v106, %v1680
    %v1682 = vand.u32 %v1681, 4294901760
    %1683 = vmatpush1.msra.mxu0 %v1682
    %v1684 = vand.u32 %v111, 4294901760
    %v1685 = vsub.f32 %v111, %v1684
    %v1686 = vand.u32 %v1685, 4294901760
    %1687 = vmatprep.subr.mxu0 %v1686
    %v1688 = vand.u32 %v110, 4294901760
    %v1689 = vsub.f32 %v110, %v1688
    %v1690 = vand.u32 %v1689, 4294901760
    %1691 = vmatpush1.msra.mxu0 %v1690
    %v1692 = vand.u32 %v115, 4294901760
    %v1693 = vsub.f32 %v115, %v1692
    %v1694 = vand.u32 %v1693, 4294901760
    %1695 = vmatprep.subr.mxu0 %v1694
    %v1696 = vand.u32 %v114, 4294901760
    %v1697 = vsub.f32 %v114, %v1696
    %v1698 = vand.u32 %v1697, 4294901760
    %1699 = vmatpush1.msra.mxu0 %v1698
    %v1700 = vand.u32 %v119, 4294901760
    %v1701 = vsub.f32 %v119, %v1700
    %v1702 = vand.u32 %v1701, 4294901760
    %1703 = vmatprep.subr.mxu0 %v1702
    %v1704 = vand.u32 %v118, 4294901760
    %v1705 = vsub.f32 %v118, %v1704
    %v1706 = vand.u32 %v1705, 4294901760
    %1707 = vmatpush1.msra.mxu0 %v1706
    %1708 = vmatprep.subr.mxu0 0.0
    %1709 = vmatpush1.msra.mxu0 0.0
    %1710 = vmatprep.subr.mxu0 0.0
    %1711 = vmatpush1.msra.mxu0 0.0
    %1712 = vmatprep.subr.mxu0 0.0
    %1713 = vmatpush1.msra.mxu0 0.0
    %1714 = vmatprep.subr.mxu0 0.0
    %1715 = vmatpush1.msra.mxu0 0.0
    %1716 = vmatprep.subr.mxu0 0.0
    %1717 = vmatpush1.msra.mxu0 0.0
    %1718 = vmatprep.subr.mxu0 0.0
    %1719 = vmatpush1.msra.mxu0 0.0
    %1720 = vmatprep.subr.mxu0 0.0
    %1721 = vmatpush1.msra.mxu0 0.0
    %1722 = vmatprep.subr.mxu0 0.0
    %1723 = vmatpush1.msra.mxu0 0.0
    %1724 = vmatprep.subr.mxu0 0.0
    %1725 = vmatpush1.msra.mxu0 0.0
    %1726 = vmatprep.subr.mxu0 0.0
    %1727 = vmatpush1.msra.mxu0 0.0
    %1728 = vmatprep.subr.mxu0 0.0
    %1729 = vmatpush1.msra.mxu0 0.0
    %1730 = vmatprep.subr.mxu0 0.0
    %1731 = vmatpush1.msra.mxu0 0.0
    %1732 = vmatprep.subr.mxu0 0.0
    %1733 = vmatpush1.msra.mxu0 0.0
    %1734 = vmatprep.subr.mxu0 0.0
    %1735 = vmatpush1.msra.mxu0 0.0
    %1736 = vmatprep.subr.mxu0 0.0
    %1737 = vmatpush1.msra.mxu0 0.0
    %1738 = vmatprep.subr.mxu0 0.0
    %1739 = vmatpush1.msra.mxu0 0.0
    %1740 = vmatprep.mubr.f32.mxu0 0.0
    %v1741 = vand.u32 %v55, 4294901760
    %1742 = vmatmul.mubr.f32.gmra.mrb[0].mxu0 %v1741
    %v1743 = vpop.f32.mrb[0].mxu0
    %v1744 = vadd.f32 %v1576, %v1743
    %v1745 = vpop.f32.mrb[0].mxu0
    %v1746 = vadd.f32 %v1578, %v1745
    %1747 = vdwg.mxu0
    %v1748 = vand.u32 %v59, 4294901760
    %1749 = vmatprep.subr.mxu0 %v1748
    %v1750 = vand.u32 %v58, 4294901760
    %1751 = vmatpush1.msra.mxu0 %v1750
    %v1752 = vand.u32 %v63, 4294901760
    %1753 = vmatprep.subr.mxu0 %v1752
    %v1754 = vand.u32 %v62, 4294901760
    %1755 = vmatpush1.msra.mxu0 %v1754
    %v1756 = vand.u32 %v67, 4294901760
    %1757 = vmatprep.subr.mxu0 %v1756
    %v1758 = vand.u32 %v66, 4294901760
    %1759 = vmatpush1.msra.mxu0 %v1758
    %v1760 = vand.u32 %v71, 4294901760
    %1761 = vmatprep.subr.mxu0 %v1760
    %v1762 = vand.u32 %v70, 4294901760
    %1763 = vmatpush1.msra.mxu0 %v1762
    %v1764 = vand.u32 %v75, 4294901760
    %1765 = vmatprep.subr.mxu0 %v1764
    %v1766 = vand.u32 %v74, 4294901760
    %1767 = vmatpush1.msra.mxu0 %v1766
    %v1768 = vand.u32 %v79, 4294901760
    %1769 = vmatprep.subr.mxu0 %v1768
    %v1770 = vand.u32 %v78, 4294901760
    %1771 = vmatpush1.msra.mxu0 %v1770
    %v1772 = vand.u32 %v83, 4294901760
    %1773 = vmatprep.subr.mxu0 %v1772
    %v1774 = vand.u32 %v82, 4294901760
    %1775 = vmatpush1.msra.mxu0 %v1774
    %v1776 = vand.u32 %v87, 4294901760
    %1777 = vmatprep.subr.mxu0 %v1776
    %v1778 = vand.u32 %v86, 4294901760
    %1779 = vmatpush1.msra.mxu0 %v1778
    %v1780 = vand.u32 %v91, 4294901760
    %1781 = vmatprep.subr.mxu0 %v1780
    %v1782 = vand.u32 %v90, 4294901760
    %1783 = vmatpush1.msra.mxu0 %v1782
    %v1784 = vand.u32 %v95, 4294901760
    %1785 = vmatprep.subr.mxu0 %v1784
    %v1786 = vand.u32 %v94, 4294901760
    %1787 = vmatpush1.msra.mxu0 %v1786
    %v1788 = vand.u32 %v99, 4294901760
    %1789 = vmatprep.subr.mxu0 %v1788
    %v1790 = vand.u32 %v98, 4294901760
    %1791 = vmatpush1.msra.mxu0 %v1790
    %v1792 = vand.u32 %v103, 4294901760
    %1793 = vmatprep.subr.mxu0 %v1792
    %v1794 = vand.u32 %v102, 4294901760
    %1795 = vmatpush1.msra.mxu0 %v1794
    %v1796 = vand.u32 %v107, 4294901760
    %1797 = vmatprep.subr.mxu0 %v1796
    %v1798 = vand.u32 %v106, 4294901760
    %1799 = vmatpush1.msra.mxu0 %v1798
    %v1800 = vand.u32 %v111, 4294901760
    %1801 = vmatprep.subr.mxu0 %v1800
    %v1802 = vand.u32 %v110, 4294901760
    %1803 = vmatpush1.msra.mxu0 %v1802
    %v1804 = vand.u32 %v115, 4294901760
    %1805 = vmatprep.subr.mxu0 %v1804
    %v1806 = vand.u32 %v114, 4294901760
    %1807 = vmatpush1.msra.mxu0 %v1806
    %v1808 = vand.u32 %v119, 4294901760
    %1809 = vmatprep.subr.mxu0 %v1808
    %v1810 = vand.u32 %v118, 4294901760
    %1811 = vmatpush1.msra.mxu0 %v1810
    %1812 = vmatprep.subr.mxu0 0.0
    %1813 = vmatpush1.msra.mxu0 0.0
    %1814 = vmatprep.subr.mxu0 0.0
    %1815 = vmatpush1.msra.mxu0 0.0
    %1816 = vmatprep.subr.mxu0 0.0
    %1817 = vmatpush1.msra.mxu0 0.0
    %1818 = vmatprep.subr.mxu0 0.0
    %1819 = vmatpush1.msra.mxu0 0.0
    %1820 = vmatprep.subr.mxu0 0.0
    %1821 = vmatpush1.msra.mxu0 0.0
    %1822 = vmatprep.subr.mxu0 0.0
    %1823 = vmatpush1.msra.mxu0 0.0
    %1824 = vmatprep.subr.mxu0 0.0
    %1825 = vmatpush1.msra.mxu0 0.0
    %1826 = vmatprep.subr.mxu0 0.0
    %1827 = vmatpush1.msra.mxu0 0.0
    %1828 = vmatprep.subr.mxu0 0.0
    %1829 = vmatpush1.msra.mxu0 0.0
    %1830 = vmatprep.subr.mxu0 0.0
    %1831 = vmatpush1.msra.mxu0 0.0
    %1832 = vmatprep.subr.mxu0 0.0
    %1833 = vmatpush1.msra.mxu0 0.0
    %1834 = vmatprep.subr.mxu0 0.0
    %1835 = vmatpush1.msra.mxu0 0.0
    %1836 = vmatprep.subr.mxu0 0.0
    %1837 = vmatpush1.msra.mxu0 0.0
    %1838 = vmatprep.subr.mxu0 0.0
    %1839 = vmatpush1.msra.mxu0 0.0
    %1840 = vmatprep.subr.mxu0 0.0
    %1841 = vmatpush1.msra.mxu0 0.0
    %1842 = vmatprep.subr.mxu0 0.0
    %1843 = vmatpush1.msra.mxu0 0.0
    %1844 = vmatprep.mubr.f32.mxu0 0.0
    %v1845 = vand.u32 %v55, 4294901760
    %1846 = vmatmul.mubr.f32.gmra.mrb[0].mxu0 %v1845
    %v1847 = vpop.f32.mrb[0].mxu0
    %v1848 = vadd.f32 %v1744, %v1847
    %v1849 = vpop.f32.mrb[0].mxu0
    %v1850 = vadd.f32 %v1746, %v1849
    %1851 = vdwg.mxu0
    %v1852 = vxor.u32 %v993, 2147483648
    %v1853 = vmul.f32 %v1852, 1.442695
    %v1854 = vpow.pop %v1853
    %v1855 = vadd.f32 %v1854, 1.0
    %v1856 = vrcp.pop %v1855
    %v1857 = vmul.f32 1.0, %v1856
    %v1858 = vxor.u32 %v995, 2147483648
    %v1859 = vmul.f32 %v1858, 1.442695
    %v1860 = vpow.pop %v1859
    %v1861 = vadd.f32 %v1860, 1.0
    %v1862 = vrcp.pop %v1861
    %v1863 = vmul.f32 1.0, %v1862
    %v1864 = vtanh.pop %v1848
    %v1865 = vxor.u32 %v1850, 2147483648
    %v1866 = vmul.f32 %v1865, 1.442695
    %v1867 = vpow.pop %v1866
    %v1868 = vadd.f32 %v1867, 1.0
    %v1869 = vrcp.pop %v1868
    %v1870 = vmul.f32 1.0, %v1869
    %v1871 = vld [vmem:[#allocation5] sm:$0xff]
    %v1872 = vmul.f32 %v1863, %v1871
    %v1873 = vmul.f32 %v1857, %v1864
    %v1874 = vadd.f32 %v1872, %v1873
    %v1875 = vtanh.pop %v1874
    %v1876 = vmul.f32 %v1870, %v1875
    %1877 = vst [vmem:[#allocation8] sm:$0xff] %v1876
    %1878 = vst [vmem:[#allocation8 + $0x8] sm:$0xff] %v1874
    // Predicated region
    $region30: #{_lstm_cell_impl.1} parent=1 // pred_check
      _
    $region31: #{_lstm_cell_impl.1} parent=1 // pred_check_branch
      %1880 = sbr.rel (0) target = $region33
    $region32: #{_lstm_cell_impl.1} parent=1 // pred_region
      %s1882 = ssub.s32 256, 256
      %1883 = vsyncadd [#allocation4], %s1882
      %s1885 = sshll.u32 [#allocation8], 4
      %s1886 = int_to_ptr.vmem [resolvable:$true] %s1885
      %1888 = dma.vmem_to_hbm [thread:$0]  %s1886, 256, %s4, [#allocation4]
    $region33: #{_lstm_cell_impl.1} parent=1 // pred_fallthru
      _
    // Predicated region
    $region34: #{_lstm_cell_impl.1} parent=1 // pred_check
      _
    $region35: #{_lstm_cell_impl.1} parent=1 // pred_check_branch
      %1890 = sbr.rel (0) target = $region37
    $region36: #{_lstm_cell_impl.1} parent=1 // pred_region
      %1891 = dma.done [#allocation4], 256
    $region37: #{_lstm_cell_impl.1} parent=1 // pred_fallthru
      _
    %1892 = vsyncpa [#allocation3], 1
    %1893 = vsyncpa [#allocation6], 1
    %1894 = vsyncpa [#allocation4], 1

</llo_original>
